<compile_context>
chip_gen: v7x
topology: tpu7x:2x2x1
jax: 0.10.0
libtpu: 0.0.40
codegen_flags: <defaults>
</compile_context>

<pallas_src>
import functools

import jax
import jax.numpy as jnp
from jax.experimental import pallas as pl
from jax.experimental.pallas import tpu as pltpu

BN_EPS = 1e-5
H1, H2, H3 = 512, 512, 256


def _round_up(x, m):
    return (x + m - 1) // m * m


# ---------------------------------------------------------------------------
# Kernel
# ---------------------------------------------------------------------------
def _splendor_kernel(
    x_ref,           # (tm, in_pad)   bf16
    w1_ref,          # (in_pad, H1)   bf16
    w2_ref,          # (H1, H2)       bf16
    w3_ref,          # (H2, H3)       bf16
    wh_ref,          # (H3, head_pad) bf16
    b_ref,           # (8, 512)       f32  rows: b1, b2, b3, bh
    out_ref,         # (tm, head_pad) f32
    *, action_size,
):
    h1 = w1_ref.shape[1]
    h2 = w2_ref.shape[1]
    h3 = w3_ref.shape[1]
    head_pad = wh_ref.shape[1]

    def dense_relu(h_bf16, w_ref, bias_row):
        y = jnp.dot(h_bf16, w_ref[...],
                    preferred_element_type=jnp.float32) + bias_row
        return jnp.maximum(y, 0.0).astype(jnp.bfloat16)

    # Three Linear -> ReLU blocks (BN folded into the next layer; Dropout is
    # identity in eval mode).
    h = dense_relu(x_ref[...], w1_ref, b_ref[0:1, :h1])
    h = dense_relu(h, w2_ref, b_ref[1:2, :h2])
    h = dense_relu(h, w3_ref, b_ref[2:3, :h3])

    # Fused policy+value head: cols [0, action_size) = policy logits,
    # col action_size = value logit, remaining cols are zero padding.
    head = jnp.dot(h, wh_ref[...],
                   preferred_element_type=jnp.float32) + b_ref[3:4, :head_pad]

    # 1-row policy mask; broadcast happens inside the selects.
    col = jax.lax.broadcasted_iota(jnp.int32, (1, head_pad), 1)
    is_pi = col < action_size

    # log_softmax over the real policy columns only.  Masked columns hold
    # -1e30, so exp(z) is exactly 0 there and no second mask is needed.
    z = jnp.where(is_pi, head, jnp.float32(-1e30))
    m = jnp.max(z, axis=1, keepdims=True)
    z = z - m
    lse = jnp.log(jnp.sum(jnp.exp(z), axis=1, keepdims=True))

    # Single lane-dense store: policy columns = log_pi, everything else gets
    # tanh(head) (the value column is the only meaningful one among those).
    out_ref[...] = jnp.where(is_pi, z - lse, jnp.tanh(head))


# ---------------------------------------------------------------------------
# Tiling choice
# ---------------------------------------------------------------------------
def _default_num_tiles(bp):
    """2 parallel batch tiles on v7x (2 TCs/chip) for large batches, else 1."""
    if bp < 512:
        return 1
    try:
        kind = jax.devices()[0].device_kind.lower()
    except Exception:  # pragma: no cover - defensive
        return 1
    return 2 if "v7" in kind else 1


def _choose_tiling(batch, tm_max, num_tiles=None):
    bp = _round_up(batch, 8)
    if num_tiles is None:
        num_tiles = _default_num_tiles(bp)
    tm = _round_up(-(-bp // num_tiles), 8)   # ceil(bp / num_tiles), 8-aligned
    tm = min(tm, tm_max)
    tm = max(tm, min(128, bp))               # never run tiny (e.g. 16-row) tiles
    tm = _round_up(tm, 8)
    bp = _round_up(bp, tm)
    return bp, tm


# ---------------------------------------------------------------------------
# Wrapper
# ---------------------------------------------------------------------------
def splendor_forward(s, prep, *, action_size, tm_max=1024, num_batch_tiles=None):
    """Forward pass.  s: (batch, input_size) or (input_size,) float32.

    prep: dict from prepare_params() (BN-folded, padded, bf16 weights,
    packed bias slab).  Returns (log_pi (batch, action_size), v (batch, 1)).
    """
    if s.ndim == 1:
        s = s[None, :]
    batch, feat = s.shape

    in_pad = prep["w1"].shape[0]
    h1 = prep["w1"].shape[1]
    h2 = prep["w2"].shape[1]
    h3 = prep["w3"].shape[1]
    head_pad = prep["wh"].shape[1]
    bias_shape = prep["bias"].shape

    bp, tm = _choose_tiling(batch, tm_max, num_batch_tiles)

    # bf16, 128-lane-dense input block.
    x = jnp.zeros((bp, in_pad), jnp.bfloat16)
    x = x.at[:batch, :feat].set(s.astype(jnp.bfloat16))

    grid = (bp // tm,)
    const = lambda i: (0, 0)  # weights/bias stay VMEM-resident across steps

    kernel = functools.partial(_splendor_kernel, action_size=action_size)

    out = pl.pallas_call(
        kernel,
        out_shape=jax.ShapeDtypeStruct((bp, head_pad), jnp.float32),
        grid_spec=pltpu.PrefetchScalarGridSpec(
            num_scalar_prefetch=0,
            grid=grid,
            in_specs=[
                pl.BlockSpec((tm, in_pad), lambda i: (i, 0)),
                pl.BlockSpec((in_pad, h1), const),
                pl.BlockSpec((h1, h2), const),
                pl.BlockSpec((h2, h3), const),
                pl.BlockSpec((h3, head_pad), const),
                pl.BlockSpec(bias_shape, const),
            ],
            out_specs=pl.BlockSpec((tm, head_pad), lambda i: (i, 0)),
        ),
        compiler_params=pltpu.CompilerParams(
            dimension_semantics=("parallel",)),
    )(x, prep["w1"], prep["w2"], prep["w3"], prep["wh"], prep["bias"])

    log_pi = out[:batch, :action_size]
    v = out[:batch, action_size:action_size + 1]
    return log_pi, v


# ---------------------------------------------------------------------------
# Parameter construction / preparation
# ---------------------------------------------------------------------------
def init_params(key, input_size, action_size):
    """Raw (torch-layout-equivalent) synthetic parameters.

    Linear weights are stored as (in_features, out_features); biases/BN vectors
    as (1, N).  BatchNorm carries (gamma, beta, running_mean, running_var).
    """
    ks = jax.random.split(key, 8)

    def lin(k, fan_in, fan_out):
        bound = 1.0 / jnp.sqrt(fan_in)
        kw, kb = jax.random.split(k)
        w = jax.random.uniform(kw, (fan_in, fan_out), jnp.float32, -bound, bound)
        b = jax.random.uniform(kb, (1, fan_out), jnp.float32, -bound, bound)
        return w, b

    def bn(k, n):
        kg, kb, km, kv = jax.random.split(k, 4)
        g = 1.0 + 0.1 * jax.random.normal(kg, (1, n), jnp.float32)
        be = 0.1 * jax.random.normal(kb, (1, n), jnp.float32)
        rm = 0.1 * jax.random.normal(km, (1, n), jnp.float32)
        rv = 1.0 + 0.1 * jax.random.uniform(kv, (1, n), jnp.float32)
        return g, be, rm, rv

    w1, b1 = lin(ks[0], input_size, H1)
    g1, be1, rm1, rv1 = bn(ks[1], H1)
    w2, b2 = lin(ks[2], H1, H2)
    g2, be2, rm2, rv2 = bn(ks[3], H2)
    w3, b3 = lin(ks[4], H2, H3)
    g3, be3, rm3, rv3 = bn(ks[5], H3)
    wp, bp = lin(ks[6], H3, action_size)
    wv, bv = lin(ks[7], H3, 1)

    return dict(
        w1=w1, b1=b1, g1=g1, be1=be1, rm1=rm1, rv1=rv1,
        w2=w2, b2=b2, g2=g2, be2=be2, rm2=rm2, rv2=rv2,
        w3=w3, b3=b3, g3=g3, be3=be3, rm3=rm3, rv3=rv3,
        wp=wp, bp=bp, wv=wv, bv=bv,
    )


def prepare_params(raw, input_size, action_size):
    """Fold BN into downstream linears, pad, fuse heads, pack biases, bf16."""
    in_pad = _round_up(input_size, 128)          # 128-lane-dense layer-1 input
    head_pad = _round_up(action_size + 1, 128)   # fused policy+value head

    def bn_fold(g, be, rm, rv):
        inv = jax.lax.rsqrt(rv + BN_EPS)
        a = (g * inv).reshape(-1)
        c = (be - rm * g * inv).reshape(-1)
        return a, c

    a1, c1 = bn_fold(raw["g1"], raw["be1"], raw["rm1"], raw["rv1"])
    a2, c2 = bn_fold(raw["g2"], raw["be2"], raw["rm2"], raw["rv2"])
    a3, c3 = bn_fold(raw["g3"], raw["be3"], raw["rm3"], raw["rv3"])

    # Layer 1 unchanged (its BN folds into layer 2).
    w1 = jnp.zeros((in_pad, H1), jnp.float32).at[:input_size].set(raw["w1"])
    b1 = raw["b1"]

    w2 = a1[:, None] * raw["w2"]
    b2 = c1[None, :] @ raw["w2"] + raw["b2"]

    w3 = a2[:, None] * raw["w3"]
    b3 = c2[None, :] @ raw["w3"] + raw["b3"]

    wp = a3[:, None] * raw["wp"]
    bp_ = c3[None, :] @ raw["wp"] + raw["bp"]
    wv = a3[:, None] * raw["wv"]
    bv = c3[None, :] @ raw["wv"] + raw["bv"]

    # Fuse policy + value heads into one padded (H3, head_pad) weight.
    wh = jnp.zeros((H3, head_pad), jnp.float32)
    wh = wh.at[:, :action_size].set(wp).at[:, action_size].set(wv[:, 0])
    bh = jnp.zeros((1, head_pad), jnp.float32)
    bh = bh.at[:, :action_size].set(bp_).at[:, action_size].set(bv[:, 0])

    # Pack the four bias rows into a single (8, 512) f32 slab (one DMA).
    bias_w = max(H1, H2, H3, head_pad)
    bias = jnp.zeros((8, bias_w), jnp.float32)
    bias = bias.at[0, :H1].set(b1[0])
    bias = bias.at[1, :H2].set(b2[0])
    bias = bias.at[2, :H3].set(b3[0])
    bias = bias.at[3, :head_pad].set(bh[0])

    bf16 = jnp.bfloat16
    return dict(
        w1=w1.astype(bf16), w2=w2.astype(bf16), w3=w3.astype(bf16),
        wh=wh.astype(bf16), bias=bias,
    )


# ---------------------------------------------------------------------------
# Pure-JAX reference (original op order, full f32)
# ---------------------------------------------------------------------------
def _reference_forward(s, p):
    if s.ndim == 1:
        s = s[None, :]

    def blk(h, w, b, g, be, rm, rv):
        y = jnp.maximum(h @ w + b, 0.0)                    # relu(dense(x))
        return (y - rm) / jnp.sqrt(rv + BN_EPS) * g + be   # bn(...)

    h = blk(s, p["w1"], p["b1"], p["g1"], p["be1"], p["rm1"], p["rv1"])
    h = blk(h, p["w2"], p["b2"], p["g2"], p["be2"], p["rm2"], p["rv2"])
    h = blk(h, p["w3"], p["b3"], p["g3"], p["be3"], p["rm3"], p["rv3"])
    pi = h @ p["wp"] + p["bp"]
    log_pi = pi - jax.scipy.special.logsumexp(pi, axis=1, keepdims=True)
    v = jnp.tanh(h @ p["wv"] + p["bv"])
    return log_pi, v


# ---------------------------------------------------------------------------
# Main
# ---------------------------------------------------------------------------
if __name__ == "__main__":
    key = jax.random.PRNGKey(0)
    k_param, k_x, k_x2 = jax.random.split(key, 3)

    INPUT_SIZE = 56    # game.getBoardSize() (flat observation length)
    ACTION_SIZE = 81   # game.getActionSize()
    BATCH = 8

    raw = init_params(k_param, INPUT_SIZE, ACTION_SIZE)
    prep = prepare_params(raw, INPUT_SIZE, ACTION_SIZE)

    # Small batch: single grid step, tm = 8.
    x = jax.random.normal(k_x, (BATCH, INPUT_SIZE), jnp.float32)
    fwd = jax.jit(functools.partial(splendor_forward, action_size=ACTION_SIZE))
    log_pi, v = fwd(x, prep)
    jax.block_until_ready((log_pi, v))

    ref_lp, ref_v = _reference_forward(x, raw)
    assert log_pi.shape == (BATCH, ACTION_SIZE)
    assert v.shape == (BATCH, 1)
    # Loose tolerance: weights/activations are bf16 in the kernel, f32 in ref.
    assert jnp.allclose(log_pi, ref_lp, atol=5e-2), float(
        jnp.max(jnp.abs(log_pi - ref_lp)))
    assert jnp.allclose(v, ref_v, atol=5e-2), float(jnp.max(jnp.abs(v - ref_v)))

    # Larger batch exercising the multi-tile grid (tm floored at 128 rows):
    # 300 rows with tm_max=128 -> 3 parallel 128-row tiles + batch padding.
    x2 = jax.random.normal(k_x2, (300, INPUT_SIZE), jnp.float32)
    fwd2 = jax.jit(functools.partial(splendor_forward,
                                     action_size=ACTION_SIZE, tm_max=128))
    lp2, v2 = fwd2(x2, prep)
    jax.block_until_ready((lp2, v2))
    r_lp2, r_v2 = _reference_forward(x2, raw)
    assert lp2.shape == (300, ACTION_SIZE) and v2.shape == (300, 1)
    assert jnp.allclose(lp2, r_lp2, atol=5e-2), float(
        jnp.max(jnp.abs(lp2 - r_lp2)))
    assert jnp.allclose(v2, r_v2, atol=5e-2), float(jnp.max(jnp.abs(v2 - r_v2)))

    print("KERNEL_OK")
</pallas_src>

<mosaic_0001>
module attributes {stable_mosaic.version = 11 : i64} {
  func.func @_splendor_kernel(%arg0: i32, %arg1: memref<8x128xbf16, #tpu.memory_space<vmem>>, %arg2: memref<128x512xbf16, #tpu.memory_space<vmem>>, %arg3: memref<512x512xbf16, #tpu.memory_space<vmem>>, %arg4: memref<512x256xbf16, #tpu.memory_space<vmem>>, %arg5: memref<256x128xbf16, #tpu.memory_space<vmem>>, %arg6: memref<8x512xf32, #tpu.memory_space<vmem>>, %arg7: memref<8x128xf32, #tpu.memory_space<vmem>>) attributes {dimension_semantics = [#tpu.dimension_semantics<parallel>], iteration_bounds = array<i64: 1>, scalar_prefetch = 0 : i64, scratch_operands = 0 : i64, tpu.core_type = #tpu.core_type<tc>, window_params = [{transform_indices = @transform_0, window_bounds = array<i64: 8, 128>}, {pipeline_mode = #tpu.pipeline_mode<synchronous>, transform_indices = @transform_1, window_bounds = array<i64: 128, 512>}, {pipeline_mode = #tpu.pipeline_mode<synchronous>, transform_indices = @transform_2, window_bounds = array<i64: 512, 512>}, {pipeline_mode = #tpu.pipeline_mode<synchronous>, transform_indices = @transform_3, window_bounds = array<i64: 512, 256>}, {pipeline_mode = #tpu.pipeline_mode<synchronous>, transform_indices = @transform_4, window_bounds = array<i64: 256, 128>}, {pipeline_mode = #tpu.pipeline_mode<synchronous>, transform_indices = @transform_5, window_bounds = array<i64: 8, 512>}, {transform_indices = @transform_6, window_bounds = array<i64: 8, 128>}]} {
    %c0 = arith.constant 0 : index
    %c0_0 = arith.constant 0 : index
    %0 = vector.load %arg1[%c0, %c0_0] : memref<8x128xbf16, #tpu.memory_space<vmem>>, vector<8x128xbf16>
    %c0_1 = arith.constant 0 : index
    %c0_2 = arith.constant 0 : index
    %1 = vector.load %arg6[%c0_1, %c0_2] : memref<8x512xf32, #tpu.memory_space<vmem>>, vector<1x512xf32>
    %c0_3 = arith.constant 0 : index
    %c0_4 = arith.constant 0 : index
    %2 = vector.load %arg2[%c0_3, %c0_4] : memref<128x512xbf16, #tpu.memory_space<vmem>>, vector<128x512xbf16>
    %cst = arith.constant dense<0.000000e+00> : vector<8x512xf32>
    %3 = tpu.matmul %0, %2, %cst {dimension_numbers = #tpu.dot_dimension_numbers<[1], [0], [0], [1], [0, 0, 1, 1], [], []>} : vector<8x128xbf16>, vector<128x512xbf16>, vector<8x512xf32> -> vector<8x512xf32>
    %4 = vector.broadcast %1 : vector<1x512xf32> to vector<8x512xf32>
    %5 = arith.addf %3, %4 : vector<8x512xf32>
    %cst_5 = arith.constant 0.000000e+00 : f32
    %6 = vector.broadcast %cst_5 : f32 to vector<8x512xf32>
    %7 = arith.maximumf %5, %6 : vector<8x512xf32>
    %8 = arith.truncf %7 : vector<8x512xf32> to vector<8x512xbf16>
    %c1 = arith.constant 1 : index
    %c0_6 = arith.constant 0 : index
    %9 = vector.load %arg6[%c1, %c0_6] : memref<8x512xf32, #tpu.memory_space<vmem>>, vector<1x512xf32>
    %c0_7 = arith.constant 0 : index
    %c0_8 = arith.constant 0 : index
    %10 = vector.load %arg3[%c0_7, %c0_8] : memref<512x512xbf16, #tpu.memory_space<vmem>>, vector<512x512xbf16>
    %cst_9 = arith.constant dense<0.000000e+00> : vector<8x512xf32>
    %11 = tpu.matmul %8, %10, %cst_9 {dimension_numbers = #tpu.dot_dimension_numbers<[1], [0], [0], [1], [0, 0, 1, 1], [], []>} : vector<8x512xbf16>, vector<512x512xbf16>, vector<8x512xf32> -> vector<8x512xf32>
    %12 = vector.broadcast %9 : vector<1x512xf32> to vector<8x512xf32>
    %13 = arith.addf %11, %12 : vector<8x512xf32>
    %cst_10 = arith.constant 0.000000e+00 : f32
    %14 = vector.broadcast %cst_10 : f32 to vector<8x512xf32>
    %15 = arith.maximumf %13, %14 : vector<8x512xf32>
    %16 = arith.truncf %15 : vector<8x512xf32> to vector<8x512xbf16>
    %c2 = arith.constant 2 : index
    %c0_11 = arith.constant 0 : index
    %17 = vector.load %arg6[%c2, %c0_11] : memref<8x512xf32, #tpu.memory_space<vmem>>, vector<1x256xf32>
    %c0_12 = arith.constant 0 : index
    %c0_13 = arith.constant 0 : index
    %18 = vector.load %arg4[%c0_12, %c0_13] : memref<512x256xbf16, #tpu.memory_space<vmem>>, vector<512x256xbf16>
    %cst_14 = arith.constant dense<0.000000e+00> : vector<8x256xf32>
    %19 = tpu.matmul %16, %18, %cst_14 {dimension_numbers = #tpu.dot_dimension_numbers<[1], [0], [0], [1], [0, 0, 1, 1], [], []>} : vector<8x512xbf16>, vector<512x256xbf16>, vector<8x256xf32> -> vector<8x256xf32>
    %20 = vector.broadcast %17 : vector<1x256xf32> to vector<8x256xf32>
    %21 = arith.addf %19, %20 : vector<8x256xf32>
    %cst_15 = arith.constant 0.000000e+00 : f32
    %22 = vector.broadcast %cst_15 : f32 to vector<8x256xf32>
    %23 = arith.maximumf %21, %22 : vector<8x256xf32>
    %24 = arith.truncf %23 : vector<8x256xf32> to vector<8x256xbf16>
    %c0_16 = arith.constant 0 : index
    %c0_17 = arith.constant 0 : index
    %25 = vector.load %arg5[%c0_16, %c0_17] : memref<256x128xbf16, #tpu.memory_space<vmem>>, vector<256x128xbf16>
    %cst_18 = arith.constant dense<0.000000e+00> : vector<8x128xf32>
    %26 = tpu.matmul %24, %25, %cst_18 {dimension_numbers = #tpu.dot_dimension_numbers<[1], [0], [0], [1], [0, 0, 1, 1], [], []>} : vector<8x256xbf16>, vector<256x128xbf16>, vector<8x128xf32> -> vector<8x128xf32>
    %c3 = arith.constant 3 : index
    %c0_19 = arith.constant 0 : index
    %27 = vector.load %arg6[%c3, %c0_19] : memref<8x512xf32, #tpu.memory_space<vmem>>, vector<1x128xf32>
    %28 = vector.broadcast %27 : vector<1x128xf32> to vector<8x128xf32>
    %29 = arith.addf %26, %28 : vector<8x128xf32>
    %30 = tpu.iota {dimensions = array<i32: 1>} : vector<1x128xi32>
    %c81_i32 = arith.constant 81 : i32
    %31 = vector.broadcast %c81_i32 : i32 to vector<1x128xi32>
    %32 = arith.cmpi slt, %30, %31 : vector<1x128xi32>
    %cst_20 = arith.constant -1.000000e+30 : f32
    %33 = vector.shape_cast %32 : vector<1x128xi1> to vector<1x128xi1>
    %34 = vector.broadcast %33 : vector<1x128xi1> to vector<8x128xi1>
    %35 = vector.broadcast %cst_20 : f32 to vector<8x128xf32>
    %36 = arith.select %34, %29, %35 : vector<8x128xi1>, vector<8x128xf32>
    %cst_21 = arith.constant dense<0xFF800000> : vector<8xf32>
    %37 = vector.multi_reduction <maximumf>, %36, %cst_21 [1] : vector<8x128xf32> to vector<8xf32>
    %38 = vector.shape_cast %37 : vector<8xf32> to vector<8x1xf32>
    %39 = vector.broadcast %38 : vector<8x1xf32> to vector<8x128xf32>
    %40 = arith.subf %36, %39 : vector<8x128xf32>
    %41 = math.exp %40 : vector<8x128xf32>
    %cst_22 = arith.constant dense<0.000000e+00> : vector<8xf32>
    %42 = vector.multi_reduction <add>, %41, %cst_22 [1] : vector<8x128xf32> to vector<8xf32>
    %43 = vector.shape_cast %42 : vector<8xf32> to vector<8x1xf32>
    %44 = math.log %43 : vector<8x1xf32>
    %45 = vector.broadcast %44 : vector<8x1xf32> to vector<8x128xf32>
    %46 = arith.subf %40, %45 : vector<8x128xf32>
    %47 = math.tanh %29 : vector<8x128xf32>
    %48 = vector.shape_cast %32 : vector<1x128xi1> to vector<1x128xi1>
    %49 = vector.broadcast %48 : vector<1x128xi1> to vector<8x128xi1>
    %50 = arith.select %49, %46, %47 : vector<8x128xi1>, vector<8x128xf32>
    %c0_23 = arith.constant 0 : index
    %c0_24 = arith.constant 0 : index
    %51 = vector.load %arg7[%c0_23, %c0_24] : memref<8x128xf32, #tpu.memory_space<vmem>>, vector<8x128xf32>
    tpu.vector_store %arg7[%c0_23, %c0_24], %50 {strides = array<i32>} : memref<8x128xf32, #tpu.memory_space<vmem>>, vector<8x128xf32>,
    return
  }
  func.func @transform_0(%arg0: i32) -> (i32, i32) {
    %c0_i32 = arith.constant 0 : i32
    %c0_i32_0 = arith.constant 0 : i32
    return %arg0, %c0_i32 : i32, i32
  }
  func.func @transform_1(%arg0: i32) -> (i32, i32) {
    %c0_i32 = arith.constant 0 : i32
    %c0_i32_0 = arith.constant 0 : i32
    %c0_i32_1 = arith.constant 0 : i32
    return %c0_i32, %c0_i32_0 : i32, i32
  }
  func.func @transform_2(%arg0: i32) -> (i32, i32) {
    %c0_i32 = arith.constant 0 : i32
    %c0_i32_0 = arith.constant 0 : i32
    %c0_i32_1 = arith.constant 0 : i32
    return %c0_i32, %c0_i32_0 : i32, i32
  }
  func.func @transform_3(%arg0: i32) -> (i32, i32) {
    %c0_i32 = arith.constant 0 : i32
    %c0_i32_0 = arith.constant 0 : i32
    %c0_i32_1 = arith.constant 0 : i32
    return %c0_i32, %c0_i32_0 : i32, i32
  }
  func.func @transform_4(%arg0: i32) -> (i32, i32) {
    %c0_i32 = arith.constant 0 : i32
    %c0_i32_0 = arith.constant 0 : i32
    %c0_i32_1 = arith.constant 0 : i32
    return %c0_i32, %c0_i32_0 : i32, i32
  }
  func.func @transform_5(%arg0: i32) -> (i32, i32) {
    %c0_i32 = arith.constant 0 : i32
    %c0_i32_0 = arith.constant 0 : i32
    %c0_i32_1 = arith.constant 0 : i32
    return %c0_i32, %c0_i32_0 : i32, i32
  }
  func.func @transform_6(%arg0: i32) -> (i32, i32) {
    %c0_i32 = arith.constant 0 : i32
    %c0_i32_0 = arith.constant 0 : i32
    return %arg0, %c0_i32 : i32, i32
  }
}

</mosaic_0001>

<llo_original>
// kernel: splendor_forward.1
$region0: #{splendor_forward.1}
  #allocation0 [shape = 'u32[]', space=smem, size = 0x4, offset = 0x4, fixed_abs, tag = 'smem constant byte address 0x4 - core index']
  #allocation1 [shape = 'u32[144,128]{1,0:T(1,128)}', space=vmem, size = 0x12000, scoped, tag = 'internal scratch']
  %s0 = inlined_call_operand.vmem [shape: bf16[8,128], index: 0, kind: input, shape index: {}]
  %s1 = inlined_call_operand.hbm [shape: bf16[128,512], index: 1, kind: input, shape index: {}]
  %s2 = inlined_call_operand.hbm [shape: bf16[512,512], index: 2, kind: input, shape index: {}]
  %s3 = inlined_call_operand.hbm [shape: bf16[512,256], index: 3, kind: input, shape index: {}]
  %s4 = inlined_call_operand.hbm [shape: bf16[256,128], index: 4, kind: input, shape index: {}]
  %s5 = inlined_call_operand.hbm [shape: f32[8,512], index: 5, kind: input, shape index: {}]
  %s6 = inlined_call_operand.vmem [shape: f32[8,128], index: 6, kind: output, shape index: {}]
  %s7 = sld [smem:[#allocation0]]
  $region54: #{splendor_forward.1} parent=0
    _
  %s9 = ssub.s32 1, %s7
  %s10 = scalar_select 0, %s9, %s7
  $region1: #{splendor_forward.1} parent=0
    #allocation2 [shape = 'u8[131072]{0}', space=vmem, size = 0x20000, scoped, tag = 'input window, operand 1, single buffered']
    #allocation3 [shape = 's32[1]{0}', space=sflag, size = 0x4, scoped, tag = 'scoped memory for splendor_forward.1']
    #allocation4 [shape = 'u8[524288]{0}', space=vmem, size = 0x80000, scoped, tag = 'input window, operand 2, single buffered']
    #allocation5 [shape = 's32[1]{0}', space=sflag, size = 0x4, scoped, tag = 'scoped memory for splendor_forward.1']
    #allocation6 [shape = 'u8[262144]{0}', space=vmem, size = 0x40000, scoped, tag = 'input window, operand 3, single buffered']
    #allocation7 [shape = 'u8[65536]{0}', space=vmem, size = 0x10000, scoped, tag = 'input window, operand 4, single buffered']
    #allocation8 [shape = 's32[1]{0}', space=sflag, size = 0x4, scoped, tag = 'scoped memory for splendor_forward.1']
    #allocation9 [shape = 'u8[16384]{0}', space=vmem, size = 0x4000, scoped, tag = 'input window, operand 5, single buffered']
    %11 = vsyncpa [#allocation3], 0
    %12 = vsyncpa [#allocation5], 0
    %13 = vsyncpa [#allocation8], 0
    // Predicated region
    $region2: #{splendor_forward.1} parent=1 // pred_check
      _
    $region3: #{splendor_forward.1} parent=1 // pred_check_branch
      %15 = sbr.rel (0) target = $region5
    $region4: #{splendor_forward.1} parent=1 // pred_region
      _
    $region5: #{splendor_forward.1} parent=1 // pred_fallthru
      _
    // Predicated region
    $region6: #{splendor_forward.1} parent=1 // pred_check
      _
    $region7: #{splendor_forward.1} parent=1 // pred_check_branch
      %17 = sbr.rel (0) target = $region9
    $region8: #{splendor_forward.1} parent=1 // pred_region
      %s19 = ssub.s32 4096, 4096
      %20 = vsyncadd [#allocation3], %s19
      %s21 = sshll.u32 [#allocation2], 4
      %s22 = int_to_ptr.vmem [resolvable:$true] %s21
      %27 = dma.hbm_to_vmem [thread:$0]  %s1, 4096, %s22, [#allocation3], 256, 256, 16
    $region9: #{splendor_forward.1} parent=1 // pred_fallthru
      _
    // Predicated region
    $region10: #{splendor_forward.1} parent=1 // pred_check
      _
    $region11: #{splendor_forward.1} parent=1 // pred_check_branch
      %29 = sbr.rel (0) target = $region13
    $region12: #{splendor_forward.1} parent=1 // pred_region
      %s31 = ssub.s32 16384, 16384
      %32 = vsyncadd [#allocation5], %s31
      %s33 = sshll.u32 [#allocation4], 4
      %s34 = int_to_ptr.vmem [resolvable:$true] %s33
      %39 = dma.hbm_to_vmem [thread:$0]  %s2, 16384, %s34, [#allocation5], 256, 256, 16
    $region13: #{splendor_forward.1} parent=1 // pred_fallthru
      _
    // Predicated region
    $region14: #{splendor_forward.1} parent=1 // pred_check
      _
    $region15: #{splendor_forward.1} parent=1 // pred_check_branch
      %41 = sbr.rel (0) target = $region17
    $region16: #{splendor_forward.1} parent=1 // pred_region
      %s43 = ssub.s32 8192, 8192
      %44 = vsyncadd [#allocation5], %s43
      %s45 = sshll.u32 [#allocation6], 4
      %s46 = int_to_ptr.vmem [resolvable:$true] %s45
      %51 = dma.hbm_to_vmem [thread:$0]  %s3, 8192, %s46, [#allocation5], 128, 128, 8
    $region17: #{splendor_forward.1} parent=1 // pred_fallthru
      _
    // Predicated region
    $region18: #{splendor_forward.1} parent=1 // pred_check
      _
    $region19: #{splendor_forward.1} parent=1 // pred_check_branch
      %53 = sbr.rel (0) target = $region21
    $region20: #{splendor_forward.1} parent=1 // pred_region
      %s55 = ssub.s32 2048, 2048
      %56 = vsyncadd [#allocation8], %s55
      %s57 = sshll.u32 [#allocation7], 4
      %s58 = int_to_ptr.vmem [resolvable:$true] %s57
      %63 = dma.hbm_to_vmem [thread:$0]  %s4, 2048, %s58, [#allocation8], 64, 64, 4
    $region21: #{splendor_forward.1} parent=1 // pred_fallthru
      _
    // Predicated region
    $region22: #{splendor_forward.1} parent=1 // pred_check
      _
    $region23: #{splendor_forward.1} parent=1 // pred_check_branch
      %65 = sbr.rel (0) target = $region25
    $region24: #{splendor_forward.1} parent=1 // pred_region
      %s67 = ssub.s32 512, 512
      %68 = vsyncadd [#allocation8], %s67
      %s70 = sshll.u32 [#allocation9], 4
      %s71 = int_to_ptr.vmem [resolvable:$true] %s70
      %73 = dma.hbm_to_vmem [thread:$0]  %s5, 512, %s71, [#allocation8]
    $region25: #{splendor_forward.1} parent=1 // pred_fallthru
      _
    // Predicated region
    $region26: #{splendor_forward.1} parent=1 // pred_check
      _
    $region27: #{splendor_forward.1} parent=1 // pred_check_branch
      %75 = sbr.rel (0) target = $region29
    $region28: #{splendor_forward.1} parent=1 // pred_region
      %76 = dma.done [#allocation3], 4096
    $region29: #{splendor_forward.1} parent=1 // pred_fallthru
      _
    // Predicated region
    $region30: #{splendor_forward.1} parent=1 // pred_check
      _
    $region31: #{splendor_forward.1} parent=1 // pred_check_branch
      %78 = sbr.rel (0) target = $region33
    $region32: #{splendor_forward.1} parent=1 // pred_region
      %79 = dma.done [#allocation5], 16384
    $region33: #{splendor_forward.1} parent=1 // pred_fallthru
      _
    // Predicated region
    $region34: #{splendor_forward.1} parent=1 // pred_check
      _
    $region35: #{splendor_forward.1} parent=1 // pred_check_branch
      %81 = sbr.rel (0) target = $region37
    $region36: #{splendor_forward.1} parent=1 // pred_region
      %82 = dma.done [#allocation5], 8192
    $region37: #{splendor_forward.1} parent=1 // pred_fallthru
      _
    // Predicated region
    $region38: #{splendor_forward.1} parent=1 // pred_check
      _
    $region39: #{splendor_forward.1} parent=1 // pred_check_branch
      %84 = sbr.rel (0) target = $region41
    $region40: #{splendor_forward.1} parent=1 // pred_region
      %85 = dma.done [#allocation8], 2048
    $region41: #{splendor_forward.1} parent=1 // pred_fallthru
      _
    // Predicated region
    $region42: #{splendor_forward.1} parent=1 // pred_check
      _
    $region43: #{splendor_forward.1} parent=1 // pred_check_branch
      %87 = sbr.rel (0) target = $region45
    $region44: #{splendor_forward.1} parent=1 // pred_region
      %88 = dma.done [#allocation8], 512
    $region45: #{splendor_forward.1} parent=1 // pred_fallthru
      _
    %v90 = vld [vmem:[%s0] sm:$0xf]
    %v91 = vld [vmem:[#allocation9] ss:$8 sm:$0xf]
    %v92 = vld [vmem:[#allocation2] sm:$0xff]
    %v93 = vld [vmem:[#allocation2 + $0x8] sm:$0xff]
    %v94 = vld [vmem:[#allocation2 + $0x10] sm:$0xff]
    %v95 = vld [vmem:[#allocation2 + $0x18] sm:$0xff]
    %v96 = vld [vmem:[#allocation2 + $0x20] sm:$0xff]
    %v97 = vld [vmem:[#allocation2 + $0x28] sm:$0xff]
    %v98 = vld [vmem:[#allocation2 + $0x30] sm:$0xff]
    %v99 = vld [vmem:[#allocation2 + $0x38] sm:$0xff]
    %v100 = vld [vmem:[#allocation2 + $0x40] sm:$0xff]
    %v101 = vld [vmem:[#allocation2 + $0x48] sm:$0xff]
    %v102 = vld [vmem:[#allocation2 + $0x50] sm:$0xff]
    %v103 = vld [vmem:[#allocation2 + $0x58] sm:$0xff]
    %v104 = vld [vmem:[#allocation2 + $0x60] sm:$0xff]
    %v105 = vld [vmem:[#allocation2 + $0x68] sm:$0xff]
    %v106 = vld [vmem:[#allocation2 + $0x70] sm:$0xff]
    %v107 = vld [vmem:[#allocation2 + $0x78] sm:$0xff]
    %v108 = vld [vmem:[#allocation2 + $0x80] sm:$0xff]
    %v109 = vld [vmem:[#allocation2 + $0x88] sm:$0xff]
    %v110 = vld [vmem:[#allocation2 + $0x90] sm:$0xff]
    %v111 = vld [vmem:[#allocation2 + $0x98] sm:$0xff]
    %v112 = vld [vmem:[#allocation2 + $0xa0] sm:$0xff]
    %v113 = vld [vmem:[#allocation2 + $0xa8] sm:$0xff]
    %v114 = vld [vmem:[#allocation2 + $0xb0] sm:$0xff]
    %v115 = vld [vmem:[#allocation2 + $0xb8] sm:$0xff]
    %v116 = vld [vmem:[#allocation2 + $0xc0] sm:$0xff]
    %v117 = vld [vmem:[#allocation2 + $0xc8] sm:$0xff]
    %v118 = vld [vmem:[#allocation2 + $0xd0] sm:$0xff]
    %v119 = vld [vmem:[#allocation2 + $0xd8] sm:$0xff]
    %v120 = vld [vmem:[#allocation2 + $0xe0] sm:$0xff]
    %v121 = vld [vmem:[#allocation2 + $0xe8] sm:$0xff]
    %v122 = vld [vmem:[#allocation2 + $0xf0] sm:$0xff]
    %v123 = vld [vmem:[#allocation2 + $0xf8] sm:$0xff]
    %v125 = vlaneseq
    %v126 = vshrl.u32 %v125, 7
    %v127 = vsub.s32 0, %v126
    %v128 = vrot.slane %v91, %v127
    %v129 = vlaneseq
    %v130 = vshrl.u32 %v129, 7
    %v131 = vsub.s32 1, %v130
    %v132 = vrot.slane %v91, %v131
    %v133 = vlaneseq
    %v134 = vshrl.u32 %v133, 7
    %v135 = vsub.s32 2, %v134
    %v136 = vrot.slane %v91, %v135
    %v137 = vlaneseq
    %v138 = vshrl.u32 %v137, 7
    %v139 = vsub.s32 3, %v138
    %v140 = vrot.slane %v91, %v139
    %v177 = vunpack.c.l.b16 %v92
    %v178 = vunpack.c.h.b16 %v92
    %v179 = vunpack.c.l.b16 %v93
    %v180 = vunpack.c.h.b16 %v93
    %v181 = vunpack.c.l.b16 %v94
    %v182 = vunpack.c.h.b16 %v94
    %v183 = vunpack.c.l.b16 %v95
    %v184 = vunpack.c.h.b16 %v95
    %v185 = vunpack.c.l.b16 %v96
    %v186 = vunpack.c.h.b16 %v96
    %v187 = vunpack.c.l.b16 %v97
    %v188 = vunpack.c.h.b16 %v97
    %v189 = vunpack.c.l.b16 %v98
    %v190 = vunpack.c.h.b16 %v98
    %v191 = vunpack.c.l.b16 %v99
    %v192 = vunpack.c.h.b16 %v99
    %v193 = vunpack.c.l.b16 %v100
    %v194 = vunpack.c.h.b16 %v100
    %v195 = vunpack.c.l.b16 %v101
    %v196 = vunpack.c.h.b16 %v101
    %v197 = vunpack.c.l.b16 %v102
    %v198 = vunpack.c.h.b16 %v102
    %v199 = vunpack.c.l.b16 %v103
    %v200 = vunpack.c.h.b16 %v103
    %v201 = vunpack.c.l.b16 %v104
    %v202 = vunpack.c.h.b16 %v104
    %v203 = vunpack.c.l.b16 %v105
    %v204 = vunpack.c.h.b16 %v105
    %v205 = vunpack.c.l.b16 %v106
    %v206 = vunpack.c.h.b16 %v106
    %v207 = vunpack.c.l.b16 %v107
    %v208 = vunpack.c.h.b16 %v107
    %v209 = vunpack.c.l.b16 %v108
    %v210 = vunpack.c.h.b16 %v108
    %v211 = vunpack.c.l.b16 %v109
    %v212 = vunpack.c.h.b16 %v109
    %v213 = vunpack.c.l.b16 %v110
    %v214 = vunpack.c.h.b16 %v110
    %v215 = vunpack.c.l.b16 %v111
    %v216 = vunpack.c.h.b16 %v111
    %v217 = vunpack.c.l.b16 %v112
    %v218 = vunpack.c.h.b16 %v112
    %v219 = vunpack.c.l.b16 %v113
    %v220 = vunpack.c.h.b16 %v113
    %v221 = vunpack.c.l.b16 %v114
    %v222 = vunpack.c.h.b16 %v114
    %v223 = vunpack.c.l.b16 %v115
    %v224 = vunpack.c.h.b16 %v115
    %v225 = vunpack.c.l.b16 %v116
    %v226 = vunpack.c.h.b16 %v116
    %v227 = vunpack.c.l.b16 %v117
    %v228 = vunpack.c.h.b16 %v117
    %v229 = vunpack.c.l.b16 %v118
    %v230 = vunpack.c.h.b16 %v118
    %v231 = vunpack.c.l.b16 %v119
    %v232 = vunpack.c.h.b16 %v119
    %v233 = vunpack.c.l.b16 %v120
    %v234 = vunpack.c.h.b16 %v120
    %v235 = vunpack.c.l.b16 %v121
    %v236 = vunpack.c.h.b16 %v121
    %v237 = vunpack.c.l.b16 %v122
    %v238 = vunpack.c.h.b16 %v122
    %v239 = vunpack.c.l.b16 %v123
    %v240 = vunpack.c.h.b16 %v123
    %v241 = vpack.c.b16 %v181, %v177
    %v242 = vpack.c.b16 %v182, %v178
    %v243 = vpack.c.b16 %v183, %v179
    %v244 = vpack.c.b16 %v184, %v180
    %v245 = vpack.c.b16 %v189, %v185
    %v246 = vpack.c.b16 %v190, %v186
    %v247 = vpack.c.b16 %v191, %v187
    %v248 = vpack.c.b16 %v192, %v188
    %v249 = vpack.c.b16 %v197, %v193
    %v250 = vpack.c.b16 %v198, %v194
    %v251 = vpack.c.b16 %v199, %v195
    %v252 = vpack.c.b16 %v200, %v196
    %v253 = vpack.c.b16 %v205, %v201
    %v254 = vpack.c.b16 %v206, %v202
    %v255 = vpack.c.b16 %v207, %v203
    %v256 = vpack.c.b16 %v208, %v204
    %v257 = vpack.c.b16 %v213, %v209
    %v258 = vpack.c.b16 %v214, %v210
    %v259 = vpack.c.b16 %v215, %v211
    %v260 = vpack.c.b16 %v216, %v212
    %v261 = vpack.c.b16 %v221, %v217
    %v262 = vpack.c.b16 %v222, %v218
    %v263 = vpack.c.b16 %v223, %v219
    %v264 = vpack.c.b16 %v224, %v220
    %v265 = vpack.c.b16 %v229, %v225
    %v266 = vpack.c.b16 %v230, %v226
    %v267 = vpack.c.b16 %v231, %v227
    %v268 = vpack.c.b16 %v232, %v228
    %v269 = vpack.c.b16 %v237, %v233
    %v270 = vpack.c.b16 %v238, %v234
    %v271 = vpack.c.b16 %v239, %v235
    %v272 = vpack.c.b16 %v240, %v236
    %305 = vmatprep.subr.bf16.mxu0 %v242
    %306 = vmatpush1.bf16.msra.mxu0 %v241
    %307 = vmatprep.subr.bf16.mxu0 %v246
    %308 = vmatpush1.bf16.msra.mxu0 %v245
    %309 = vmatprep.subr.bf16.mxu0 %v250
    %310 = vmatpush1.bf16.msra.mxu0 %v249
    %311 = vmatprep.subr.bf16.mxu0 %v254
    %312 = vmatpush1.bf16.msra.mxu0 %v253
    %313 = vmatprep.subr.bf16.mxu0 %v258
    %314 = vmatpush1.bf16.msra.mxu0 %v257
    %315 = vmatprep.subr.bf16.mxu0 %v262
    %316 = vmatpush1.bf16.msra.mxu0 %v261
    %317 = vmatprep.subr.bf16.mxu0 %v266
    %318 = vmatpush1.bf16.msra.mxu0 %v265
    %319 = vmatprep.subr.bf16.mxu0 %v270
    %320 = vmatpush1.bf16.msra.mxu0 %v269
    %321 = vmatprep.subr.bf16.mxu0 0
    %322 = vmatpush1.bf16.msra.mxu0 0
    %323 = vmatprep.subr.bf16.mxu0 0
    %324 = vmatpush1.bf16.msra.mxu0 0
    %325 = vmatprep.subr.bf16.mxu0 0
    %326 = vmatpush1.bf16.msra.mxu0 0
    %327 = vmatprep.subr.bf16.mxu0 0
    %328 = vmatpush1.bf16.msra.mxu0 0
    %329 = vmatprep.subr.bf16.mxu0 0
    %330 = vmatpush1.bf16.msra.mxu0 0
    %331 = vmatprep.subr.bf16.mxu0 0
    %332 = vmatpush1.bf16.msra.mxu0 0
    %333 = vmatprep.subr.bf16.mxu0 0
    %334 = vmatpush1.bf16.msra.mxu0 0
    %335 = vmatprep.subr.bf16.mxu0 0
    %336 = vmatpush1.bf16.msra.mxu0 0
    %337 = vmatprep.mubr.bf16.mxu0 0
    %338 = vmatmul.mubr.bf16.gmra.mrb[0].mxu0 %v90
    %v339 = vpop.f32.mrb[0].mxu0
    %v340 = vadd.f32 %v128, %v339
    %v341 = vpop.f32.mrb[0].mxu0
    %v342 = vadd.f32 %v132, %v341
    %v343 = vpop.f32.mrb[0].mxu0
    %v344 = vpop.f32.mrb[0].mxu0
    %345 = vdwg.mxu0
    %346 = vmatprep.subr.bf16.mxu0 %v244
    %347 = vmatpush1.bf16.msra.mxu0 %v243
    %348 = vmatprep.subr.bf16.mxu0 %v248
    %349 = vmatpush1.bf16.msra.mxu0 %v247
    %350 = vmatprep.subr.bf16.mxu0 %v252
    %351 = vmatpush1.bf16.msra.mxu0 %v251
    %352 = vmatprep.subr.bf16.mxu0 %v256
    %353 = vmatpush1.bf16.msra.mxu0 %v255
    %354 = vmatprep.subr.bf16.mxu0 %v260
    %355 = vmatpush1.bf16.msra.mxu0 %v259
    %356 = vmatprep.subr.bf16.mxu0 %v264
    %357 = vmatpush1.bf16.msra.mxu0 %v263
    %358 = vmatprep.subr.bf16.mxu0 %v268
    %359 = vmatpush1.bf16.msra.mxu0 %v267
    %360 = vmatprep.subr.bf16.mxu0 %v272
    %361 = vmatpush1.bf16.msra.mxu0 %v271
    %362 = vmatprep.subr.bf16.mxu0 0
    %363 = vmatpush1.bf16.msra.mxu0 0
    %364 = vmatprep.subr.bf16.mxu0 0
    %365 = vmatpush1.bf16.msra.mxu0 0
    %366 = vmatprep.subr.bf16.mxu0 0
    %367 = vmatpush1.bf16.msra.mxu0 0
    %368 = vmatprep.subr.bf16.mxu0 0
    %369 = vmatpush1.bf16.msra.mxu0 0
    %370 = vmatprep.subr.bf16.mxu0 0
    %371 = vmatpush1.bf16.msra.mxu0 0
    %372 = vmatprep.subr.bf16.mxu0 0
    %373 = vmatpush1.bf16.msra.mxu0 0
    %374 = vmatprep.subr.bf16.mxu0 0
    %375 = vmatpush1.bf16.msra.mxu0 0
    %376 = vmatprep.subr.bf16.mxu0 0
    %377 = vmatpush1.bf16.msra.mxu0 0
    %378 = vmatprep.mubr.bf16.mxu0 0
    %379 = vmatmul.mubr.bf16.gmra.mrb[0].mxu0 %v90
    %v380 = vpop.f32.mrb[0].mxu0
    %v381 = vadd.f32 %v136, %v380
    %v382 = vpop.f32.mrb[0].mxu0
    %v383 = vadd.f32 %v140, %v382
    %v384 = vpop.f32.mrb[0].mxu0
    %v385 = vpop.f32.mrb[0].mxu0
    %386 = vdwg.mxu0
    %v387 = vmax.f32 %v340, 0.0
    %v388 = vmax.f32 %v342, 0.0
    %v389 = vmax.f32 %v381, 0.0
    %v390 = vmax.f32 %v383, 0.0
    %v391 = vpack.c.bf16 %v387, %v387
    %v392 = vpack.c.bf16 %v388, %v388
    %v393 = vpack.c.bf16 %v389, %v389
    %v394 = vpack.c.bf16 %v390, %v390
    %s395 = scalar_lea.vmem [#allocation9], 1
    %v396 = vld [vmem:[%s395] ss:$8 sm:$0xf]
    %v397 = vld [vmem:[#allocation4] sm:$0xff]
    %v398 = vld [vmem:[#allocation4 + $0x8] sm:$0xff]
    %v399 = vld [vmem:[#allocation4 + $0x10] sm:$0xff]
    %v400 = vld [vmem:[#allocation4 + $0x18] sm:$0xff]
    %v401 = vld [vmem:[#allocation4 + $0x20] sm:$0xff]
    %v402 = vld [vmem:[#allocation4 + $0x28] sm:$0xff]
    %v403 = vld [vmem:[#allocation4 + $0x30] sm:$0xff]
    %v404 = vld [vmem:[#allocation4 + $0x38] sm:$0xff]
    %v405 = vld [vmem:[#allocation4 + $0x40] sm:$0xff]
    %v406 = vld [vmem:[#allocation4 + $0x48] sm:$0xff]
    %v407 = vld [vmem:[#allocation4 + $0x50] sm:$0xff]
    %v408 = vld [vmem:[#allocation4 + $0x58] sm:$0xff]
    %v409 = vld [vmem:[#allocation4 + $0x60] sm:$0xff]
    %v410 = vld [vmem:[#allocation4 + $0x68] sm:$0xff]
    %v411 = vld [vmem:[#allocation4 + $0x70] sm:$0xff]
    %v412 = vld [vmem:[#allocation4 + $0x78] sm:$0xff]
    %v413 = vld [vmem:[#allocation4 + $0x80] sm:$0xff]
    %v414 = vld [vmem:[#allocation4 + $0x88] sm:$0xff]
    %v415 = vld [vmem:[#allocation4 + $0x90] sm:$0xff]
    %v416 = vld [vmem:[#allocation4 + $0x98] sm:$0xff]
    %v417 = vld [vmem:[#allocation4 + $0xa0] sm:$0xff]
    %v418 = vld [vmem:[#allocation4 + $0xa8] sm:$0xff]
    %v419 = vld [vmem:[#allocation4 + $0xb0] sm:$0xff]
    %v420 = vld [vmem:[#allocation4 + $0xb8] sm:$0xff]
    %v421 = vld [vmem:[#allocation4 + $0xc0] sm:$0xff]
    %v422 = vld [vmem:[#allocation4 + $0xc8] sm:$0xff]
    %v423 = vld [vmem:[#allocation4 + $0xd0] sm:$0xff]
    %v424 = vld [vmem:[#allocation4 + $0xd8] sm:$0xff]
    %v425 = vld [vmem:[#allocation4 + $0xe0] sm:$0xff]
    %v426 = vld [vmem:[#allocation4 + $0xe8] sm:$0xff]
    %v427 = vld [vmem:[#allocation4 + $0xf0] sm:$0xff]
    %v428 = vld [vmem:[#allocation4 + $0xf8] sm:$0xff]
    %v429 = vld [vmem:[#allocation4 + $0x100] sm:$0xff]
    %v430 = vld [vmem:[#allocation4 + $0x108] sm:$0xff]
    %v431 = vld [vmem:[#allocation4 + $0x110] sm:$0xff]
    %v432 = vld [vmem:[#allocation4 + $0x118] sm:$0xff]
    %v433 = vld [vmem:[#allocation4 + $0x120] sm:$0xff]
    %v434 = vld [vmem:[#allocation4 + $0x128] sm:$0xff]
    %v435 = vld [vmem:[#allocation4 + $0x130] sm:$0xff]
    %v436 = vld [vmem:[#allocation4 + $0x138] sm:$0xff]
    %v437 = vld [vmem:[#allocation4 + $0x140] sm:$0xff]
    %v438 = vld [vmem:[#allocation4 + $0x148] sm:$0xff]
    %v439 = vld [vmem:[#allocation4 + $0x150] sm:$0xff]
    %v440 = vld [vmem:[#allocation4 + $0x158] sm:$0xff]
    %v441 = vld [vmem:[#allocation4 + $0x160] sm:$0xff]
    %v442 = vld [vmem:[#allocation4 + $0x168] sm:$0xff]
    %v443 = vld [vmem:[#allocation4 + $0x170] sm:$0xff]
    %v444 = vld [vmem:[#allocation4 + $0x178] sm:$0xff]
    %v445 = vld [vmem:[#allocation4 + $0x180] sm:$0xff]
    %v446 = vld [vmem:[#allocation4 + $0x188] sm:$0xff]
    %v447 = vld [vmem:[#allocation4 + $0x190] sm:$0xff]
    %v448 = vld [vmem:[#allocation4 + $0x198] sm:$0xff]
    %v449 = vld [vmem:[#allocation4 + $0x1a0] sm:$0xff]
    %v450 = vld [vmem:[#allocation4 + $0x1a8] sm:$0xff]
    %v451 = vld [vmem:[#allocation4 + $0x1b0] sm:$0xff]
    %v452 = vld [vmem:[#allocation4 + $0x1b8] sm:$0xff]
    %v453 = vld [vmem:[#allocation4 + $0x1c0] sm:$0xff]
    %v454 = vld [vmem:[#allocation4 + $0x1c8] sm:$0xff]
    %v455 = vld [vmem:[#allocation4 + $0x1d0] sm:$0xff]
    %v456 = vld [vmem:[#allocation4 + $0x1d8] sm:$0xff]
    %v457 = vld [vmem:[#allocation4 + $0x1e0] sm:$0xff]
    %v458 = vld [vmem:[#allocation4 + $0x1e8] sm:$0xff]
    %v459 = vld [vmem:[#allocation4 + $0x1f0] sm:$0xff]
    %v460 = vld [vmem:[#allocation4 + $0x1f8] sm:$0xff]
    %v461 = vld [vmem:[#allocation4 + $0x200] sm:$0xff]
    %v462 = vld [vmem:[#allocation4 + $0x208] sm:$0xff]
    %v463 = vld [vmem:[#allocation4 + $0x210] sm:$0xff]
    %v464 = vld [vmem:[#allocation4 + $0x218] sm:$0xff]
    %v465 = vld [vmem:[#allocation4 + $0x220] sm:$0xff]
    %v466 = vld [vmem:[#allocation4 + $0x228] sm:$0xff]
    %v467 = vld [vmem:[#allocation4 + $0x230] sm:$0xff]
    %v468 = vld [vmem:[#allocation4 + $0x238] sm:$0xff]
    %v469 = vld [vmem:[#allocation4 + $0x240] sm:$0xff]
    %v470 = vld [vmem:[#allocation4 + $0x248] sm:$0xff]
    %v471 = vld [vmem:[#allocation4 + $0x250] sm:$0xff]
    %v472 = vld [vmem:[#allocation4 + $0x258] sm:$0xff]
    %v473 = vld [vmem:[#allocation4 + $0x260] sm:$0xff]
    %v474 = vld [vmem:[#allocation4 + $0x268] sm:$0xff]
    %v475 = vld [vmem:[#allocation4 + $0x270] sm:$0xff]
    %v476 = vld [vmem:[#allocation4 + $0x278] sm:$0xff]
    %v477 = vld [vmem:[#allocation4 + $0x280] sm:$0xff]
    %v478 = vld [vmem:[#allocation4 + $0x288] sm:$0xff]
    %v479 = vld [vmem:[#allocation4 + $0x290] sm:$0xff]
    %v480 = vld [vmem:[#allocation4 + $0x298] sm:$0xff]
    %v481 = vld [vmem:[#allocation4 + $0x2a0] sm:$0xff]
    %v482 = vld [vmem:[#allocation4 + $0x2a8] sm:$0xff]
    %v483 = vld [vmem:[#allocation4 + $0x2b0] sm:$0xff]
    %v484 = vld [vmem:[#allocation4 + $0x2b8] sm:$0xff]
    %v485 = vld [vmem:[#allocation4 + $0x2c0] sm:$0xff]
    %v486 = vld [vmem:[#allocation4 + $0x2c8] sm:$0xff]
    %v487 = vld [vmem:[#allocation4 + $0x2d0] sm:$0xff]
    %v488 = vld [vmem:[#allocation4 + $0x2d8] sm:$0xff]
    %v489 = vld [vmem:[#allocation4 + $0x2e0] sm:$0xff]
    %v490 = vld [vmem:[#allocation4 + $0x2e8] sm:$0xff]
    %v491 = vld [vmem:[#allocation4 + $0x2f0] sm:$0xff]
    %v492 = vld [vmem:[#allocation4 + $0x2f8] sm:$0xff]
    %v493 = vld [vmem:[#allocation4 + $0x300] sm:$0xff]
    %v494 = vld [vmem:[#allocation4 + $0x308] sm:$0xff]
    %v495 = vld [vmem:[#allocation4 + $0x310] sm:$0xff]
    %v496 = vld [vmem:[#allocation4 + $0x318] sm:$0xff]
    %v497 = vld [vmem:[#allocation4 + $0x320] sm:$0xff]
    %v498 = vld [vmem:[#allocation4 + $0x328] sm:$0xff]
    %v499 = vld [vmem:[#allocation4 + $0x330] sm:$0xff]
    %v500 = vld [vmem:[#allocation4 + $0x338] sm:$0xff]
    %v501 = vld [vmem:[#allocation4 + $0x340] sm:$0xff]
    %v502 = vld [vmem:[#allocation4 + $0x348] sm:$0xff]
    %v503 = vld [vmem:[#allocation4 + $0x350] sm:$0xff]
    %v504 = vld [vmem:[#allocation4 + $0x358] sm:$0xff]
    %v505 = vld [vmem:[#allocation4 + $0x360] sm:$0xff]
    %v506 = vld [vmem:[#allocation4 + $0x368] sm:$0xff]
    %v507 = vld [vmem:[#allocation4 + $0x370] sm:$0xff]
    %v508 = vld [vmem:[#allocation4 + $0x378] sm:$0xff]
    %v509 = vld [vmem:[#allocation4 + $0x380] sm:$0xff]
    %v510 = vld [vmem:[#allocation4 + $0x388] sm:$0xff]
    %v511 = vld [vmem:[#allocation4 + $0x390] sm:$0xff]
    %v512 = vld [vmem:[#allocation4 + $0x398] sm:$0xff]
    %v513 = vld [vmem:[#allocation4 + $0x3a0] sm:$0xff]
    %v514 = vld [vmem:[#allocation4 + $0x3a8] sm:$0xff]
    %v515 = vld [vmem:[#allocation4 + $0x3b0] sm:$0xff]
    %v516 = vld [vmem:[#allocation4 + $0x3b8] sm:$0xff]
    %v517 = vld [vmem:[#allocation4 + $0x3c0] sm:$0xff]
    %v518 = vld [vmem:[#allocation4 + $0x3c8] sm:$0xff]
    %v519 = vld [vmem:[#allocation4 + $0x3d0] sm:$0xff]
    %v520 = vld [vmem:[#allocation4 + $0x3d8] sm:$0xff]
    %v521 = vld [vmem:[#allocation4 + $0x3e0] sm:$0xff]
    %v522 = vld [vmem:[#allocation4 + $0x3e8] sm:$0xff]
    %v523 = vld [vmem:[#allocation4 + $0x3f0] sm:$0xff]
    %v524 = vld [vmem:[#allocation4 + $0x3f8] sm:$0xff]
    %v526 = vlaneseq
    %v527 = vshrl.u32 %v526, 7
    %v528 = vsub.s32 0, %v527
    %v529 = vrot.slane %v396, %v528
    %v530 = vlaneseq
    %v531 = vshrl.u32 %v530, 7
    %v532 = vsub.s32 1, %v531
    %v533 = vrot.slane %v396, %v532
    %v534 = vlaneseq
    %v535 = vshrl.u32 %v534, 7
    %v536 = vsub.s32 2, %v535
    %v537 = vrot.slane %v396, %v536
    %v538 = vlaneseq
    %v539 = vshrl.u32 %v538, 7
    %v540 = vsub.s32 3, %v539
    %v541 = vrot.slane %v396, %v540
    %v674 = vunpack.c.l.b16 %v397
    %v675 = vunpack.c.h.b16 %v397
    %v676 = vunpack.c.l.b16 %v398
    %v677 = vunpack.c.h.b16 %v398
    %v678 = vunpack.c.l.b16 %v399
    %v679 = vunpack.c.h.b16 %v399
    %v680 = vunpack.c.l.b16 %v400
    %v681 = vunpack.c.h.b16 %v400
    %v682 = vunpack.c.l.b16 %v401
    %v683 = vunpack.c.h.b16 %v401
    %v684 = vunpack.c.l.b16 %v402
    %v685 = vunpack.c.h.b16 %v402
    %v686 = vunpack.c.l.b16 %v403
    %v687 = vunpack.c.h.b16 %v403
    %v688 = vunpack.c.l.b16 %v404
    %v689 = vunpack.c.h.b16 %v404
    %v690 = vunpack.c.l.b16 %v405
    %v691 = vunpack.c.h.b16 %v405
    %v692 = vunpack.c.l.b16 %v406
    %v693 = vunpack.c.h.b16 %v406
    %v694 = vunpack.c.l.b16 %v407
    %v695 = vunpack.c.h.b16 %v407
    %v696 = vunpack.c.l.b16 %v408
    %v697 = vunpack.c.h.b16 %v408
    %v698 = vunpack.c.l.b16 %v409
    %v699 = vunpack.c.h.b16 %v409
    %v700 = vunpack.c.l.b16 %v410
    %v701 = vunpack.c.h.b16 %v410
    %v702 = vunpack.c.l.b16 %v411
    %v703 = vunpack.c.h.b16 %v411
    %v704 = vunpack.c.l.b16 %v412
    %v705 = vunpack.c.h.b16 %v412
    %v706 = vunpack.c.l.b16 %v413
    %v707 = vunpack.c.h.b16 %v413
    %v708 = vunpack.c.l.b16 %v414
    %v709 = vunpack.c.h.b16 %v414
    %v710 = vunpack.c.l.b16 %v415
    %v711 = vunpack.c.h.b16 %v415
    %v712 = vunpack.c.l.b16 %v416
    %v713 = vunpack.c.h.b16 %v416
    %v714 = vunpack.c.l.b16 %v417
    %v715 = vunpack.c.h.b16 %v417
    %v716 = vunpack.c.l.b16 %v418
    %v717 = vunpack.c.h.b16 %v418
    %v718 = vunpack.c.l.b16 %v419
    %v719 = vunpack.c.h.b16 %v419
    %v720 = vunpack.c.l.b16 %v420
    %v721 = vunpack.c.h.b16 %v420
    %v722 = vunpack.c.l.b16 %v421
    %v723 = vunpack.c.h.b16 %v421
    %v724 = vunpack.c.l.b16 %v422
    %v725 = vunpack.c.h.b16 %v422
    %v726 = vunpack.c.l.b16 %v423
    %v727 = vunpack.c.h.b16 %v423
    %v728 = vunpack.c.l.b16 %v424
    %v729 = vunpack.c.h.b16 %v424
    %v730 = vunpack.c.l.b16 %v425
    %v731 = vunpack.c.h.b16 %v425
    %v732 = vunpack.c.l.b16 %v426
    %v733 = vunpack.c.h.b16 %v426
    %v734 = vunpack.c.l.b16 %v427
    %v735 = vunpack.c.h.b16 %v427
    %v736 = vunpack.c.l.b16 %v428
    %v737 = vunpack.c.h.b16 %v428
    %v738 = vunpack.c.l.b16 %v429
    %v739 = vunpack.c.h.b16 %v429
    %v740 = vunpack.c.l.b16 %v430
    %v741 = vunpack.c.h.b16 %v430
    %v742 = vunpack.c.l.b16 %v431
    %v743 = vunpack.c.h.b16 %v431
    %v744 = vunpack.c.l.b16 %v432
    %v745 = vunpack.c.h.b16 %v432
    %v746 = vunpack.c.l.b16 %v433
    %v747 = vunpack.c.h.b16 %v433
    %v748 = vunpack.c.l.b16 %v434
    %v749 = vunpack.c.h.b16 %v434
    %v750 = vunpack.c.l.b16 %v435
    %v751 = vunpack.c.h.b16 %v435
    %v752 = vunpack.c.l.b16 %v436
    %v753 = vunpack.c.h.b16 %v436
    %v754 = vunpack.c.l.b16 %v437
    %v755 = vunpack.c.h.b16 %v437
    %v756 = vunpack.c.l.b16 %v438
    %v757 = vunpack.c.h.b16 %v438
    %v758 = vunpack.c.l.b16 %v439
    %v759 = vunpack.c.h.b16 %v439
    %v760 = vunpack.c.l.b16 %v440
    %v761 = vunpack.c.h.b16 %v440
    %v762 = vunpack.c.l.b16 %v441
    %v763 = vunpack.c.h.b16 %v441
    %v764 = vunpack.c.l.b16 %v442
    %v765 = vunpack.c.h.b16 %v442
    %v766 = vunpack.c.l.b16 %v443
    %v767 = vunpack.c.h.b16 %v443
    %v768 = vunpack.c.l.b16 %v444
    %v769 = vunpack.c.h.b16 %v444
    %v770 = vunpack.c.l.b16 %v445
    %v771 = vunpack.c.h.b16 %v445
    %v772 = vunpack.c.l.b16 %v446
    %v773 = vunpack.c.h.b16 %v446
    %v774 = vunpack.c.l.b16 %v447
    %v775 = vunpack.c.h.b16 %v447
    %v776 = vunpack.c.l.b16 %v448
    %v777 = vunpack.c.h.b16 %v448
    %v778 = vunpack.c.l.b16 %v449
    %v779 = vunpack.c.h.b16 %v449
    %v780 = vunpack.c.l.b16 %v450
    %v781 = vunpack.c.h.b16 %v450
    %v782 = vunpack.c.l.b16 %v451
    %v783 = vunpack.c.h.b16 %v451
    %v784 = vunpack.c.l.b16 %v452
    %v785 = vunpack.c.h.b16 %v452
    %v786 = vunpack.c.l.b16 %v453
    %v787 = vunpack.c.h.b16 %v453
    %v788 = vunpack.c.l.b16 %v454
    %v789 = vunpack.c.h.b16 %v454
    %v790 = vunpack.c.l.b16 %v455
    %v791 = vunpack.c.h.b16 %v455
    %v792 = vunpack.c.l.b16 %v456
    %v793 = vunpack.c.h.b16 %v456
    %v794 = vunpack.c.l.b16 %v457
    %v795 = vunpack.c.h.b16 %v457
    %v796 = vunpack.c.l.b16 %v458
    %v797 = vunpack.c.h.b16 %v458
    %v798 = vunpack.c.l.b16 %v459
    %v799 = vunpack.c.h.b16 %v459
    %v800 = vunpack.c.l.b16 %v460
    %v801 = vunpack.c.h.b16 %v460
    %v802 = vunpack.c.l.b16 %v461
    %v803 = vunpack.c.h.b16 %v461
    %v804 = vunpack.c.l.b16 %v462
    %v805 = vunpack.c.h.b16 %v462
    %v806 = vunpack.c.l.b16 %v463
    %v807 = vunpack.c.h.b16 %v463
    %v808 = vunpack.c.l.b16 %v464
    %v809 = vunpack.c.h.b16 %v464
    %v810 = vunpack.c.l.b16 %v465
    %v811 = vunpack.c.h.b16 %v465
    %v812 = vunpack.c.l.b16 %v466
    %v813 = vunpack.c.h.b16 %v466
    %v814 = vunpack.c.l.b16 %v467
    %v815 = vunpack.c.h.b16 %v467
    %v816 = vunpack.c.l.b16 %v468
    %v817 = vunpack.c.h.b16 %v468
    %v818 = vunpack.c.l.b16 %v469
    %v819 = vunpack.c.h.b16 %v469
    %v820 = vunpack.c.l.b16 %v470
    %v821 = vunpack.c.h.b16 %v470
    %v822 = vunpack.c.l.b16 %v471
    %v823 = vunpack.c.h.b16 %v471
    %v824 = vunpack.c.l.b16 %v472
    %v825 = vunpack.c.h.b16 %v472
    %v826 = vunpack.c.l.b16 %v473
    %v827 = vunpack.c.h.b16 %v473
    %v828 = vunpack.c.l.b16 %v474
    %v829 = vunpack.c.h.b16 %v474
    %v830 = vunpack.c.l.b16 %v475
    %v831 = vunpack.c.h.b16 %v475
    %v832 = vunpack.c.l.b16 %v476
    %v833 = vunpack.c.h.b16 %v476
    %v834 = vunpack.c.l.b16 %v477
    %v835 = vunpack.c.h.b16 %v477
    %v836 = vunpack.c.l.b16 %v478
    %v837 = vunpack.c.h.b16 %v478
    %v838 = vunpack.c.l.b16 %v479
    %v839 = vunpack.c.h.b16 %v479
    %v840 = vunpack.c.l.b16 %v480
    %v841 = vunpack.c.h.b16 %v480
    %v842 = vunpack.c.l.b16 %v481
    %v843 = vunpack.c.h.b16 %v481
    %v844 = vunpack.c.l.b16 %v482
    %v845 = vunpack.c.h.b16 %v482
    %v846 = vunpack.c.l.b16 %v483
    %v847 = vunpack.c.h.b16 %v483
    %v848 = vunpack.c.l.b16 %v484
    %v849 = vunpack.c.h.b16 %v484
    %v850 = vunpack.c.l.b16 %v485
    %v851 = vunpack.c.h.b16 %v485
    %v852 = vunpack.c.l.b16 %v486
    %v853 = vunpack.c.h.b16 %v486
    %v854 = vunpack.c.l.b16 %v487
    %v855 = vunpack.c.h.b16 %v487
    %v856 = vunpack.c.l.b16 %v488
    %v857 = vunpack.c.h.b16 %v488
    %v858 = vunpack.c.l.b16 %v489
    %v859 = vunpack.c.h.b16 %v489
    %v860 = vunpack.c.l.b16 %v490
    %v861 = vunpack.c.h.b16 %v490
    %v862 = vunpack.c.l.b16 %v491
    %v863 = vunpack.c.h.b16 %v491
    %v864 = vunpack.c.l.b16 %v492
    %v865 = vunpack.c.h.b16 %v492
    %v866 = vunpack.c.l.b16 %v493
    %v867 = vunpack.c.h.b16 %v493
    %v868 = vunpack.c.l.b16 %v494
    %v869 = vunpack.c.h.b16 %v494
    %v870 = vunpack.c.l.b16 %v495
    %v871 = vunpack.c.h.b16 %v495
    %v872 = vunpack.c.l.b16 %v496
    %v873 = vunpack.c.h.b16 %v496
    %v874 = vunpack.c.l.b16 %v497
    %v875 = vunpack.c.h.b16 %v497
    %v876 = vunpack.c.l.b16 %v498
    %v877 = vunpack.c.h.b16 %v498
    %v878 = vunpack.c.l.b16 %v499
    %v879 = vunpack.c.h.b16 %v499
    %v880 = vunpack.c.l.b16 %v500
    %v881 = vunpack.c.h.b16 %v500
    %v882 = vunpack.c.l.b16 %v501
    %v883 = vunpack.c.h.b16 %v501
    %v884 = vunpack.c.l.b16 %v502
    %v885 = vunpack.c.h.b16 %v502
    %v886 = vunpack.c.l.b16 %v503
    %v887 = vunpack.c.h.b16 %v503
    %v888 = vunpack.c.l.b16 %v504
    %v889 = vunpack.c.h.b16 %v504
    %v890 = vunpack.c.l.b16 %v505
    %v891 = vunpack.c.h.b16 %v505
    %v892 = vunpack.c.l.b16 %v506
    %v893 = vunpack.c.h.b16 %v506
    %v894 = vunpack.c.l.b16 %v507
    %v895 = vunpack.c.h.b16 %v507
    %v896 = vunpack.c.l.b16 %v508
    %v897 = vunpack.c.h.b16 %v508
    %v898 = vunpack.c.l.b16 %v509
    %v899 = vunpack.c.h.b16 %v509
    %v900 = vunpack.c.l.b16 %v510
    %v901 = vunpack.c.h.b16 %v510
    %v902 = vunpack.c.l.b16 %v511
    %v903 = vunpack.c.h.b16 %v511
    %v904 = vunpack.c.l.b16 %v512
    %v905 = vunpack.c.h.b16 %v512
    %v906 = vunpack.c.l.b16 %v513
    %v907 = vunpack.c.h.b16 %v513
    %v908 = vunpack.c.l.b16 %v514
    %v909 = vunpack.c.h.b16 %v514
    %v910 = vunpack.c.l.b16 %v515
    %v911 = vunpack.c.h.b16 %v515
    %v912 = vunpack.c.l.b16 %v516
    %v913 = vunpack.c.h.b16 %v516
    %v914 = vunpack.c.l.b16 %v517
    %v915 = vunpack.c.h.b16 %v517
    %v916 = vunpack.c.l.b16 %v518
    %v917 = vunpack.c.h.b16 %v518
    %v918 = vunpack.c.l.b16 %v519
    %v919 = vunpack.c.h.b16 %v519
    %v920 = vunpack.c.l.b16 %v520
    %v921 = vunpack.c.h.b16 %v520
    %v922 = vunpack.c.l.b16 %v521
    %v923 = vunpack.c.h.b16 %v521
    %v924 = vunpack.c.l.b16 %v522
    %v925 = vunpack.c.h.b16 %v522
    %v926 = vunpack.c.l.b16 %v523
    %v927 = vunpack.c.h.b16 %v523
    %v928 = vunpack.c.l.b16 %v524
    %v929 = vunpack.c.h.b16 %v524
    %v930 = vpack.c.b16 %v678, %v674
    %v931 = vpack.c.b16 %v679, %v675
    %v932 = vpack.c.b16 %v680, %v676
    %v933 = vpack.c.b16 %v681, %v677
    %v934 = vpack.c.b16 %v686, %v682
    %v935 = vpack.c.b16 %v687, %v683
    %v936 = vpack.c.b16 %v688, %v684
    %v937 = vpack.c.b16 %v689, %v685
    %v938 = vpack.c.b16 %v694, %v690
    %v939 = vpack.c.b16 %v695, %v691
    %v940 = vpack.c.b16 %v696, %v692
    %v941 = vpack.c.b16 %v697, %v693
    %v942 = vpack.c.b16 %v702, %v698
    %v943 = vpack.c.b16 %v703, %v699
    %v944 = vpack.c.b16 %v704, %v700
    %v945 = vpack.c.b16 %v705, %v701
    %v946 = vpack.c.b16 %v710, %v706
    %v947 = vpack.c.b16 %v711, %v707
    %v948 = vpack.c.b16 %v712, %v708
    %v949 = vpack.c.b16 %v713, %v709
    %v950 = vpack.c.b16 %v718, %v714
    %v951 = vpack.c.b16 %v719, %v715
    %v952 = vpack.c.b16 %v720, %v716
    %v953 = vpack.c.b16 %v721, %v717
    %v954 = vpack.c.b16 %v726, %v722
    %v955 = vpack.c.b16 %v727, %v723
    %v956 = vpack.c.b16 %v728, %v724
    %v957 = vpack.c.b16 %v729, %v725
    %v958 = vpack.c.b16 %v734, %v730
    %v959 = vpack.c.b16 %v735, %v731
    %v960 = vpack.c.b16 %v736, %v732
    %v961 = vpack.c.b16 %v737, %v733
    %v962 = vpack.c.b16 %v742, %v738
    %v963 = vpack.c.b16 %v743, %v739
    %v964 = vpack.c.b16 %v744, %v740
    %v965 = vpack.c.b16 %v745, %v741
    %v966 = vpack.c.b16 %v750, %v746
    %v967 = vpack.c.b16 %v751, %v747
    %v968 = vpack.c.b16 %v752, %v748
    %v969 = vpack.c.b16 %v753, %v749
    %v970 = vpack.c.b16 %v758, %v754
    %v971 = vpack.c.b16 %v759, %v755
    %v972 = vpack.c.b16 %v760, %v756
    %v973 = vpack.c.b16 %v761, %v757
    %v974 = vpack.c.b16 %v766, %v762
    %v975 = vpack.c.b16 %v767, %v763
    %v976 = vpack.c.b16 %v768, %v764
    %v977 = vpack.c.b16 %v769, %v765
    %v978 = vpack.c.b16 %v774, %v770
    %v979 = vpack.c.b16 %v775, %v771
    %v980 = vpack.c.b16 %v776, %v772
    %v981 = vpack.c.b16 %v777, %v773
    %v982 = vpack.c.b16 %v782, %v778
    %v983 = vpack.c.b16 %v783, %v779
    %v984 = vpack.c.b16 %v784, %v780
    %v985 = vpack.c.b16 %v785, %v781
    %v986 = vpack.c.b16 %v790, %v786
    %v987 = vpack.c.b16 %v791, %v787
    %v988 = vpack.c.b16 %v792, %v788
    %v989 = vpack.c.b16 %v793, %v789
    %v990 = vpack.c.b16 %v798, %v794
    %v991 = vpack.c.b16 %v799, %v795
    %v992 = vpack.c.b16 %v800, %v796
    %v993 = vpack.c.b16 %v801, %v797
    %v994 = vpack.c.b16 %v806, %v802
    %v995 = vpack.c.b16 %v807, %v803
    %v996 = vpack.c.b16 %v808, %v804
    %v997 = vpack.c.b16 %v809, %v805
    %v998 = vpack.c.b16 %v814, %v810
    %v999 = vpack.c.b16 %v815, %v811
    %v1000 = vpack.c.b16 %v816, %v812
    %v1001 = vpack.c.b16 %v817, %v813
    %v1002 = vpack.c.b16 %v822, %v818
    %v1003 = vpack.c.b16 %v823, %v819
    %v1004 = vpack.c.b16 %v824, %v820
    %v1005 = vpack.c.b16 %v825, %v821
    %v1006 = vpack.c.b16 %v830, %v826
    %v1007 = vpack.c.b16 %v831, %v827
    %v1008 = vpack.c.b16 %v832, %v828
    %v1009 = vpack.c.b16 %v833, %v829
    %v1010 = vpack.c.b16 %v838, %v834
    %v1011 = vpack.c.b16 %v839, %v835
    %v1012 = vpack.c.b16 %v840, %v836
    %v1013 = vpack.c.b16 %v841, %v837
    %v1014 = vpack.c.b16 %v846, %v842
    %v1015 = vpack.c.b16 %v847, %v843
    %v1016 = vpack.c.b16 %v848, %v844
    %v1017 = vpack.c.b16 %v849, %v845
    %v1018 = vpack.c.b16 %v854, %v850
    %v1019 = vpack.c.b16 %v855, %v851
    %v1020 = vpack.c.b16 %v856, %v852
    %v1021 = vpack.c.b16 %v857, %v853
    %v1022 = vpack.c.b16 %v862, %v858
    %v1023 = vpack.c.b16 %v863, %v859
    %v1024 = vpack.c.b16 %v864, %v860
    %v1025 = vpack.c.b16 %v865, %v861
    %v1026 = vpack.c.b16 %v870, %v866
    %v1027 = vpack.c.b16 %v871, %v867
    %v1028 = vpack.c.b16 %v872, %v868
    %v1029 = vpack.c.b16 %v873, %v869
    %v1030 = vpack.c.b16 %v878, %v874
    %v1031 = vpack.c.b16 %v879, %v875
    %v1032 = vpack.c.b16 %v880, %v876
    %v1033 = vpack.c.b16 %v881, %v877
    %v1034 = vpack.c.b16 %v886, %v882
    %v1035 = vpack.c.b16 %v887, %v883
    %v1036 = vpack.c.b16 %v888, %v884
    %v1037 = vpack.c.b16 %v889, %v885
    %v1038 = vpack.c.b16 %v894, %v890
    %v1039 = vpack.c.b16 %v895, %v891
    %v1040 = vpack.c.b16 %v896, %v892
    %v1041 = vpack.c.b16 %v897, %v893
    %v1042 = vpack.c.b16 %v902, %v898
    %v1043 = vpack.c.b16 %v903, %v899
    %v1044 = vpack.c.b16 %v904, %v900
    %v1045 = vpack.c.b16 %v905, %v901
    %v1046 = vpack.c.b16 %v910, %v906
    %v1047 = vpack.c.b16 %v911, %v907
    %v1048 = vpack.c.b16 %v912, %v908
    %v1049 = vpack.c.b16 %v913, %v909
    %v1050 = vpack.c.b16 %v918, %v914
    %v1051 = vpack.c.b16 %v919, %v915
    %v1052 = vpack.c.b16 %v920, %v916
    %v1053 = vpack.c.b16 %v921, %v917
    %v1054 = vpack.c.b16 %v926, %v922
    %v1055 = vpack.c.b16 %v927, %v923
    %v1056 = vpack.c.b16 %v928, %v924
    %v1057 = vpack.c.b16 %v929, %v925
    %1186 = vmatprep.subr.bf16.mxu0 %v931
    %1187 = vmatpush1.bf16.msra.mxu0 %v930
    %1188 = vmatprep.subr.bf16.mxu0 %v935
    %1189 = vmatpush1.bf16.msra.mxu0 %v934
    %1190 = vmatprep.subr.bf16.mxu0 %v939
    %1191 = vmatpush1.bf16.msra.mxu0 %v938
    %1192 = vmatprep.subr.bf16.mxu0 %v943
    %1193 = vmatpush1.bf16.msra.mxu0 %v942
    %1194 = vmatprep.subr.bf16.mxu0 %v947
    %1195 = vmatpush1.bf16.msra.mxu0 %v946
    %1196 = vmatprep.subr.bf16.mxu0 %v951
    %1197 = vmatpush1.bf16.msra.mxu0 %v950
    %1198 = vmatprep.subr.bf16.mxu0 %v955
    %1199 = vmatpush1.bf16.msra.mxu0 %v954
    %1200 = vmatprep.subr.bf16.mxu0 %v959
    %1201 = vmatpush1.bf16.msra.mxu0 %v958
    %1202 = vmatprep.subr.bf16.mxu0 %v963
    %1203 = vmatpush1.bf16.msra.mxu0 %v962
    %1204 = vmatprep.subr.bf16.mxu0 %v967
    %1205 = vmatpush1.bf16.msra.mxu0 %v966
    %1206 = vmatprep.subr.bf16.mxu0 %v971
    %1207 = vmatpush1.bf16.msra.mxu0 %v970
    %1208 = vmatprep.subr.bf16.mxu0 %v975
    %1209 = vmatpush1.bf16.msra.mxu0 %v974
    %1210 = vmatprep.subr.bf16.mxu0 %v979
    %1211 = vmatpush1.bf16.msra.mxu0 %v978
    %1212 = vmatprep.subr.bf16.mxu0 %v983
    %1213 = vmatpush1.bf16.msra.mxu0 %v982
    %1214 = vmatprep.subr.bf16.mxu0 %v987
    %1215 = vmatpush1.bf16.msra.mxu0 %v986
    %1216 = vmatprep.subr.bf16.mxu0 %v991
    %1217 = vmatpush1.bf16.msra.mxu0 %v990
    %1218 = vmatprep.mubr.bf16.mxu0 %v392
    %1219 = vmatmul.mubr.bf16.gmra.mrb[0].mxu0 %v391
    %v1220 = vpop.f32.mrb[0].mxu0
    %v1221 = vadd.f32 %v529, %v1220
    %v1222 = vpop.f32.mrb[0].mxu0
    %v1223 = vadd.f32 %v533, %v1222
    %v1224 = vpop.f32.mrb[0].mxu0
    %v1225 = vpop.f32.mrb[0].mxu0
    %1226 = vdwg.mxu0
    %1227 = vmatprep.subr.bf16.mxu0 %v995
    %1228 = vmatpush1.bf16.msra.mxu0 %v994
    %1229 = vmatprep.subr.bf16.mxu0 %v999
    %1230 = vmatpush1.bf16.msra.mxu0 %v998
    %1231 = vmatprep.subr.bf16.mxu0 %v1003
    %1232 = vmatpush1.bf16.msra.mxu0 %v1002
    %1233 = vmatprep.subr.bf16.mxu0 %v1007
    %1234 = vmatpush1.bf16.msra.mxu0 %v1006
    %1235 = vmatprep.subr.bf16.mxu0 %v1011
    %1236 = vmatpush1.bf16.msra.mxu0 %v1010
    %1237 = vmatprep.subr.bf16.mxu0 %v1015
    %1238 = vmatpush1.bf16.msra.mxu0 %v1014
    %1239 = vmatprep.subr.bf16.mxu0 %v1019
    %1240 = vmatpush1.bf16.msra.mxu0 %v1018
    %1241 = vmatprep.subr.bf16.mxu0 %v1023
    %1242 = vmatpush1.bf16.msra.mxu0 %v1022
    %1243 = vmatprep.subr.bf16.mxu0 %v1027
    %1244 = vmatpush1.bf16.msra.mxu0 %v1026
    %1245 = vmatprep.subr.bf16.mxu0 %v1031
    %1246 = vmatpush1.bf16.msra.mxu0 %v1030
    %1247 = vmatprep.subr.bf16.mxu0 %v1035
    %1248 = vmatpush1.bf16.msra.mxu0 %v1034
    %1249 = vmatprep.subr.bf16.mxu0 %v1039
    %1250 = vmatpush1.bf16.msra.mxu0 %v1038
    %1251 = vmatprep.subr.bf16.mxu0 %v1043
    %1252 = vmatpush1.bf16.msra.mxu0 %v1042
    %1253 = vmatprep.subr.bf16.mxu0 %v1047
    %1254 = vmatpush1.bf16.msra.mxu0 %v1046
    %1255 = vmatprep.subr.bf16.mxu0 %v1051
    %1256 = vmatpush1.bf16.msra.mxu0 %v1050
    %1257 = vmatprep.subr.bf16.mxu0 %v1055
    %1258 = vmatpush1.bf16.msra.mxu0 %v1054
    %1259 = vmatprep.mubr.bf16.mxu0 %v394
    %1260 = vmatmul.mubr.bf16.gmra.mrb[0].mxu0 %v393
    %v1261 = vpop.f32.mrb[0].mxu0
    %v1262 = vadd.f32 %v1221, %v1261
    %v1263 = vpop.f32.mrb[0].mxu0
    %v1264 = vadd.f32 %v1223, %v1263
    %v1265 = vpop.f32.mrb[0].mxu0
    %v1266 = vpop.f32.mrb[0].mxu0
    %1267 = vdwg.mxu0
    %1268 = vmatprep.subr.bf16.mxu0 %v933
    %1269 = vmatpush1.bf16.msra.mxu0 %v932
    %1270 = vmatprep.subr.bf16.mxu0 %v937
    %1271 = vmatpush1.bf16.msra.mxu0 %v936
    %1272 = vmatprep.subr.bf16.mxu0 %v941
    %1273 = vmatpush1.bf16.msra.mxu0 %v940
    %1274 = vmatprep.subr.bf16.mxu0 %v945
    %1275 = vmatpush1.bf16.msra.mxu0 %v944
    %1276 = vmatprep.subr.bf16.mxu0 %v949
    %1277 = vmatpush1.bf16.msra.mxu0 %v948
    %1278 = vmatprep.subr.bf16.mxu0 %v953
    %1279 = vmatpush1.bf16.msra.mxu0 %v952
    %1280 = vmatprep.subr.bf16.mxu0 %v957
    %1281 = vmatpush1.bf16.msra.mxu0 %v956
    %1282 = vmatprep.subr.bf16.mxu0 %v961
    %1283 = vmatpush1.bf16.msra.mxu0 %v960
    %1284 = vmatprep.subr.bf16.mxu0 %v965
    %1285 = vmatpush1.bf16.msra.mxu0 %v964
    %1286 = vmatprep.subr.bf16.mxu0 %v969
    %1287 = vmatpush1.bf16.msra.mxu0 %v968
    %1288 = vmatprep.subr.bf16.mxu0 %v973
    %1289 = vmatpush1.bf16.msra.mxu0 %v972
    %1290 = vmatprep.subr.bf16.mxu0 %v977
    %1291 = vmatpush1.bf16.msra.mxu0 %v976
    %1292 = vmatprep.subr.bf16.mxu0 %v981
    %1293 = vmatpush1.bf16.msra.mxu0 %v980
    %1294 = vmatprep.subr.bf16.mxu0 %v985
    %1295 = vmatpush1.bf16.msra.mxu0 %v984
    %1296 = vmatprep.subr.bf16.mxu0 %v989
    %1297 = vmatpush1.bf16.msra.mxu0 %v988
    %1298 = vmatprep.subr.bf16.mxu0 %v993
    %1299 = vmatpush1.bf16.msra.mxu0 %v992
    %1300 = vmatprep.mubr.bf16.mxu0 %v392
    %1301 = vmatmul.mubr.bf16.gmra.mrb[0].mxu0 %v391
    %v1302 = vpop.f32.mrb[0].mxu0
    %v1303 = vadd.f32 %v537, %v1302
    %v1304 = vpop.f32.mrb[0].mxu0
    %v1305 = vadd.f32 %v541, %v1304
    %v1306 = vpop.f32.mrb[0].mxu0
    %v1307 = vpop.f32.mrb[0].mxu0
    %1308 = vdwg.mxu0
    %1309 = vmatprep.subr.bf16.mxu0 %v997
    %1310 = vmatpush1.bf16.msra.mxu0 %v996
    %1311 = vmatprep.subr.bf16.mxu0 %v1001
    %1312 = vmatpush1.bf16.msra.mxu0 %v1000
    %1313 = vmatprep.subr.bf16.mxu0 %v1005
    %1314 = vmatpush1.bf16.msra.mxu0 %v1004
    %1315 = vmatprep.subr.bf16.mxu0 %v1009
    %1316 = vmatpush1.bf16.msra.mxu0 %v1008
    %1317 = vmatprep.subr.bf16.mxu0 %v1013
    %1318 = vmatpush1.bf16.msra.mxu0 %v1012
    %1319 = vmatprep.subr.bf16.mxu0 %v1017
    %1320 = vmatpush1.bf16.msra.mxu0 %v1016
    %1321 = vmatprep.subr.bf16.mxu0 %v1021
    %1322 = vmatpush1.bf16.msra.mxu0 %v1020
    %1323 = vmatprep.subr.bf16.mxu0 %v1025
    %1324 = vmatpush1.bf16.msra.mxu0 %v1024
    %1325 = vmatprep.subr.bf16.mxu0 %v1029
    %1326 = vmatpush1.bf16.msra.mxu0 %v1028
    %1327 = vmatprep.subr.bf16.mxu0 %v1033
    %1328 = vmatpush1.bf16.msra.mxu0 %v1032
    %1329 = vmatprep.subr.bf16.mxu0 %v1037
    %1330 = vmatpush1.bf16.msra.mxu0 %v1036
    %1331 = vmatprep.subr.bf16.mxu0 %v1041
    %1332 = vmatpush1.bf16.msra.mxu0 %v1040
    %1333 = vmatprep.subr.bf16.mxu0 %v1045
    %1334 = vmatpush1.bf16.msra.mxu0 %v1044
    %1335 = vmatprep.subr.bf16.mxu0 %v1049
    %1336 = vmatpush1.bf16.msra.mxu0 %v1048
    %1337 = vmatprep.subr.bf16.mxu0 %v1053
    %1338 = vmatpush1.bf16.msra.mxu0 %v1052
    %1339 = vmatprep.subr.bf16.mxu0 %v1057
    %1340 = vmatpush1.bf16.msra.mxu0 %v1056
    %1341 = vmatprep.mubr.bf16.mxu0 %v394
    %1342 = vmatmul.mubr.bf16.gmra.mrb[0].mxu0 %v393
    %v1343 = vpop.f32.mrb[0].mxu0
    %v1344 = vadd.f32 %v1303, %v1343
    %v1345 = vpop.f32.mrb[0].mxu0
    %v1346 = vadd.f32 %v1305, %v1345
    %v1347 = vpop.f32.mrb[0].mxu0
    %v1348 = vpop.f32.mrb[0].mxu0
    %1349 = vdwg.mxu0
    %v1350 = vmax.f32 %v1262, 0.0
    %v1351 = vmax.f32 %v1264, 0.0
    %v1352 = vmax.f32 %v1344, 0.0
    %v1353 = vmax.f32 %v1346, 0.0
    %v1354 = vpack.c.bf16 %v1350, %v1350
    %v1355 = vpack.c.bf16 %v1351, %v1351
    %v1356 = vpack.c.bf16 %v1352, %v1352
    %v1357 = vpack.c.bf16 %v1353, %v1353
    %s1358 = scalar_lea.vmem [#allocation9], 2
    %v1359 = vld [vmem:[%s1358] ss:$8 sm:$0x3]
    %v1360 = vld [vmem:[#allocation6] sm:$0xff]
    %v1361 = vld [vmem:[#allocation6 + $0x8] sm:$0xff]
    %v1362 = vld [vmem:[#allocation6 + $0x10] sm:$0xff]
    %v1363 = vld [vmem:[#allocation6 + $0x18] sm:$0xff]
    %v1364 = vld [vmem:[#allocation6 + $0x20] sm:$0xff]
    %v1365 = vld [vmem:[#allocation6 + $0x28] sm:$0xff]
    %v1366 = vld [vmem:[#allocation6 + $0x30] sm:$0xff]
    %v1367 = vld [vmem:[#allocation6 + $0x38] sm:$0xff]
    %v1368 = vld [vmem:[#allocation6 + $0x40] sm:$0xff]
    %v1369 = vld [vmem:[#allocation6 + $0x48] sm:$0xff]
    %v1370 = vld [vmem:[#allocation6 + $0x50] sm:$0xff]
    %v1371 = vld [vmem:[#allocation6 + $0x58] sm:$0xff]
    %v1372 = vld [vmem:[#allocation6 + $0x60] sm:$0xff]
    %v1373 = vld [vmem:[#allocation6 + $0x68] sm:$0xff]
    %v1374 = vld [vmem:[#allocation6 + $0x70] sm:$0xff]
    %v1375 = vld [vmem:[#allocation6 + $0x78] sm:$0xff]
    %v1376 = vld [vmem:[#allocation6 + $0x80] sm:$0xff]
    %v1377 = vld [vmem:[#allocation6 + $0x88] sm:$0xff]
    %v1378 = vld [vmem:[#allocation6 + $0x90] sm:$0xff]
    %v1379 = vld [vmem:[#allocation6 + $0x98] sm:$0xff]
    %v1380 = vld [vmem:[#allocation6 + $0xa0] sm:$0xff]
    %v1381 = vld [vmem:[#allocation6 + $0xa8] sm:$0xff]
    %v1382 = vld [vmem:[#allocation6 + $0xb0] sm:$0xff]
    %v1383 = vld [vmem:[#allocation6 + $0xb8] sm:$0xff]
    %v1384 = vld [vmem:[#allocation6 + $0xc0] sm:$0xff]
    %v1385 = vld [vmem:[#allocation6 + $0xc8] sm:$0xff]
    %v1386 = vld [vmem:[#allocation6 + $0xd0] sm:$0xff]
    %v1387 = vld [vmem:[#allocation6 + $0xd8] sm:$0xff]
    %v1388 = vld [vmem:[#allocation6 + $0xe0] sm:$0xff]
    %v1389 = vld [vmem:[#allocation6 + $0xe8] sm:$0xff]
    %v1390 = vld [vmem:[#allocation6 + $0xf0] sm:$0xff]
    %v1391 = vld [vmem:[#allocation6 + $0xf8] sm:$0xff]
    %v1392 = vld [vmem:[#allocation6 + $0x100] sm:$0xff]
    %v1393 = vld [vmem:[#allocation6 + $0x108] sm:$0xff]
    %v1394 = vld [vmem:[#allocation6 + $0x110] sm:$0xff]
    %v1395 = vld [vmem:[#allocation6 + $0x118] sm:$0xff]
    %v1396 = vld [vmem:[#allocation6 + $0x120] sm:$0xff]
    %v1397 = vld [vmem:[#allocation6 + $0x128] sm:$0xff]
    %v1398 = vld [vmem:[#allocation6 + $0x130] sm:$0xff]
    %v1399 = vld [vmem:[#allocation6 + $0x138] sm:$0xff]
    %v1400 = vld [vmem:[#allocation6 + $0x140] sm:$0xff]
    %v1401 = vld [vmem:[#allocation6 + $0x148] sm:$0xff]
    %v1402 = vld [vmem:[#allocation6 + $0x150] sm:$0xff]
    %v1403 = vld [vmem:[#allocation6 + $0x158] sm:$0xff]
    %v1404 = vld [vmem:[#allocation6 + $0x160] sm:$0xff]
    %v1405 = vld [vmem:[#allocation6 + $0x168] sm:$0xff]
    %v1406 = vld [vmem:[#allocation6 + $0x170] sm:$0xff]
    %v1407 = vld [vmem:[#allocation6 + $0x178] sm:$0xff]
    %v1408 = vld [vmem:[#allocation6 + $0x180] sm:$0xff]
    %v1409 = vld [vmem:[#allocation6 + $0x188] sm:$0xff]
    %v1410 = vld [vmem:[#allocation6 + $0x190] sm:$0xff]
    %v1411 = vld [vmem:[#allocation6 + $0x198] sm:$0xff]
    %v1412 = vld [vmem:[#allocation6 + $0x1a0] sm:$0xff]
    %v1413 = vld [vmem:[#allocation6 + $0x1a8] sm:$0xff]
    %v1414 = vld [vmem:[#allocation6 + $0x1b0] sm:$0xff]
    %v1415 = vld [vmem:[#allocation6 + $0x1b8] sm:$0xff]
    %v1416 = vld [vmem:[#allocation6 + $0x1c0] sm:$0xff]
    %v1417 = vld [vmem:[#allocation6 + $0x1c8] sm:$0xff]
    %v1418 = vld [vmem:[#allocation6 + $0x1d0] sm:$0xff]
    %v1419 = vld [vmem:[#allocation6 + $0x1d8] sm:$0xff]
    %v1420 = vld [vmem:[#allocation6 + $0x1e0] sm:$0xff]
    %v1421 = vld [vmem:[#allocation6 + $0x1e8] sm:$0xff]
    %v1422 = vld [vmem:[#allocation6 + $0x1f0] sm:$0xff]
    %v1423 = vld [vmem:[#allocation6 + $0x1f8] sm:$0xff]
    %v1425 = vlaneseq
    %v1426 = vshrl.u32 %v1425, 7
    %v1427 = vsub.s32 0, %v1426
    %v1428 = vrot.slane %v1359, %v1427
    %v1429 = vlaneseq
    %v1430 = vshrl.u32 %v1429, 7
    %v1431 = vsub.s32 1, %v1430
    %v1432 = vrot.slane %v1359, %v1431
    %v1499 = vunpack.c.l.b16 %v1360
    %v1500 = vunpack.c.h.b16 %v1360
    %v1501 = vunpack.c.l.b16 %v1361
    %v1502 = vunpack.c.h.b16 %v1361
    %v1503 = vunpack.c.l.b16 %v1362
    %v1504 = vunpack.c.h.b16 %v1362
    %v1505 = vunpack.c.l.b16 %v1363
    %v1506 = vunpack.c.h.b16 %v1363
    %v1507 = vunpack.c.l.b16 %v1364
    %v1508 = vunpack.c.h.b16 %v1364
    %v1509 = vunpack.c.l.b16 %v1365
    %v1510 = vunpack.c.h.b16 %v1365
    %v1511 = vunpack.c.l.b16 %v1366
    %v1512 = vunpack.c.h.b16 %v1366
    %v1513 = vunpack.c.l.b16 %v1367
    %v1514 = vunpack.c.h.b16 %v1367
    %v1515 = vunpack.c.l.b16 %v1368
    %v1516 = vunpack.c.h.b16 %v1368
    %v1517 = vunpack.c.l.b16 %v1369
    %v1518 = vunpack.c.h.b16 %v1369
    %v1519 = vunpack.c.l.b16 %v1370
    %v1520 = vunpack.c.h.b16 %v1370
    %v1521 = vunpack.c.l.b16 %v1371
    %v1522 = vunpack.c.h.b16 %v1371
    %v1523 = vunpack.c.l.b16 %v1372
    %v1524 = vunpack.c.h.b16 %v1372
    %v1525 = vunpack.c.l.b16 %v1373
    %v1526 = vunpack.c.h.b16 %v1373
    %v1527 = vunpack.c.l.b16 %v1374
    %v1528 = vunpack.c.h.b16 %v1374
    %v1529 = vunpack.c.l.b16 %v1375
    %v1530 = vunpack.c.h.b16 %v1375
    %v1531 = vunpack.c.l.b16 %v1376
    %v1532 = vunpack.c.h.b16 %v1376
    %v1533 = vunpack.c.l.b16 %v1377
    %v1534 = vunpack.c.h.b16 %v1377
    %v1535 = vunpack.c.l.b16 %v1378
    %v1536 = vunpack.c.h.b16 %v1378
    %v1537 = vunpack.c.l.b16 %v1379
    %v1538 = vunpack.c.h.b16 %v1379
    %v1539 = vunpack.c.l.b16 %v1380
    %v1540 = vunpack.c.h.b16 %v1380
    %v1541 = vunpack.c.l.b16 %v1381
    %v1542 = vunpack.c.h.b16 %v1381
    %v1543 = vunpack.c.l.b16 %v1382
    %v1544 = vunpack.c.h.b16 %v1382
    %v1545 = vunpack.c.l.b16 %v1383
    %v1546 = vunpack.c.h.b16 %v1383
    %v1547 = vunpack.c.l.b16 %v1384
    %v1548 = vunpack.c.h.b16 %v1384
    %v1549 = vunpack.c.l.b16 %v1385
    %v1550 = vunpack.c.h.b16 %v1385
    %v1551 = vunpack.c.l.b16 %v1386
    %v1552 = vunpack.c.h.b16 %v1386
    %v1553 = vunpack.c.l.b16 %v1387
    %v1554 = vunpack.c.h.b16 %v1387
    %v1555 = vunpack.c.l.b16 %v1388
    %v1556 = vunpack.c.h.b16 %v1388
    %v1557 = vunpack.c.l.b16 %v1389
    %v1558 = vunpack.c.h.b16 %v1389
    %v1559 = vunpack.c.l.b16 %v1390
    %v1560 = vunpack.c.h.b16 %v1390
    %v1561 = vunpack.c.l.b16 %v1391
    %v1562 = vunpack.c.h.b16 %v1391
    %v1563 = vunpack.c.l.b16 %v1392
    %v1564 = vunpack.c.h.b16 %v1392
    %v1565 = vunpack.c.l.b16 %v1393
    %v1566 = vunpack.c.h.b16 %v1393
    %v1567 = vunpack.c.l.b16 %v1394
    %v1568 = vunpack.c.h.b16 %v1394
    %v1569 = vunpack.c.l.b16 %v1395
    %v1570 = vunpack.c.h.b16 %v1395
    %v1571 = vunpack.c.l.b16 %v1396
    %v1572 = vunpack.c.h.b16 %v1396
    %v1573 = vunpack.c.l.b16 %v1397
    %v1574 = vunpack.c.h.b16 %v1397
    %v1575 = vunpack.c.l.b16 %v1398
    %v1576 = vunpack.c.h.b16 %v1398
    %v1577 = vunpack.c.l.b16 %v1399
    %v1578 = vunpack.c.h.b16 %v1399
    %v1579 = vunpack.c.l.b16 %v1400
    %v1580 = vunpack.c.h.b16 %v1400
    %v1581 = vunpack.c.l.b16 %v1401
    %v1582 = vunpack.c.h.b16 %v1401
    %v1583 = vunpack.c.l.b16 %v1402
    %v1584 = vunpack.c.h.b16 %v1402
    %v1585 = vunpack.c.l.b16 %v1403
    %v1586 = vunpack.c.h.b16 %v1403
    %v1587 = vunpack.c.l.b16 %v1404
    %v1588 = vunpack.c.h.b16 %v1404
    %v1589 = vunpack.c.l.b16 %v1405
    %v1590 = vunpack.c.h.b16 %v1405
    %v1591 = vunpack.c.l.b16 %v1406
    %v1592 = vunpack.c.h.b16 %v1406
    %v1593 = vunpack.c.l.b16 %v1407
    %v1594 = vunpack.c.h.b16 %v1407
    %v1595 = vunpack.c.l.b16 %v1408
    %v1596 = vunpack.c.h.b16 %v1408
    %v1597 = vunpack.c.l.b16 %v1409
    %v1598 = vunpack.c.h.b16 %v1409
    %v1599 = vunpack.c.l.b16 %v1410
    %v1600 = vunpack.c.h.b16 %v1410
    %v1601 = vunpack.c.l.b16 %v1411
    %v1602 = vunpack.c.h.b16 %v1411
    %v1603 = vunpack.c.l.b16 %v1412
    %v1604 = vunpack.c.h.b16 %v1412
    %v1605 = vunpack.c.l.b16 %v1413
    %v1606 = vunpack.c.h.b16 %v1413
    %v1607 = vunpack.c.l.b16 %v1414
    %v1608 = vunpack.c.h.b16 %v1414
    %v1609 = vunpack.c.l.b16 %v1415
    %v1610 = vunpack.c.h.b16 %v1415
    %v1611 = vunpack.c.l.b16 %v1416
    %v1612 = vunpack.c.h.b16 %v1416
    %v1613 = vunpack.c.l.b16 %v1417
    %v1614 = vunpack.c.h.b16 %v1417
    %v1615 = vunpack.c.l.b16 %v1418
    %v1616 = vunpack.c.h.b16 %v1418
    %v1617 = vunpack.c.l.b16 %v1419
    %v1618 = vunpack.c.h.b16 %v1419
    %v1619 = vunpack.c.l.b16 %v1420
    %v1620 = vunpack.c.h.b16 %v1420
    %v1621 = vunpack.c.l.b16 %v1421
    %v1622 = vunpack.c.h.b16 %v1421
    %v1623 = vunpack.c.l.b16 %v1422
    %v1624 = vunpack.c.h.b16 %v1422
    %v1625 = vunpack.c.l.b16 %v1423
    %v1626 = vunpack.c.h.b16 %v1423
    %v1627 = vpack.c.b16 %v1501, %v1499
    %v1628 = vpack.c.b16 %v1502, %v1500
    %v1629 = vpack.c.b16 %v1505, %v1503
    %v1630 = vpack.c.b16 %v1506, %v1504
    %v1631 = vpack.c.b16 %v1509, %v1507
    %v1632 = vpack.c.b16 %v1510, %v1508
    %v1633 = vpack.c.b16 %v1513, %v1511
    %v1634 = vpack.c.b16 %v1514, %v1512
    %v1635 = vpack.c.b16 %v1517, %v1515
    %v1636 = vpack.c.b16 %v1518, %v1516
    %v1637 = vpack.c.b16 %v1521, %v1519
    %v1638 = vpack.c.b16 %v1522, %v1520
    %v1639 = vpack.c.b16 %v1525, %v1523
    %v1640 = vpack.c.b16 %v1526, %v1524
    %v1641 = vpack.c.b16 %v1529, %v1527
    %v1642 = vpack.c.b16 %v1530, %v1528
    %v1643 = vpack.c.b16 %v1533, %v1531
    %v1644 = vpack.c.b16 %v1534, %v1532
    %v1645 = vpack.c.b16 %v1537, %v1535
    %v1646 = vpack.c.b16 %v1538, %v1536
    %v1647 = vpack.c.b16 %v1541, %v1539
    %v1648 = vpack.c.b16 %v1542, %v1540
    %v1649 = vpack.c.b16 %v1545, %v1543
    %v1650 = vpack.c.b16 %v1546, %v1544
    %v1651 = vpack.c.b16 %v1549, %v1547
    %v1652 = vpack.c.b16 %v1550, %v1548
    %v1653 = vpack.c.b16 %v1553, %v1551
    %v1654 = vpack.c.b16 %v1554, %v1552
    %v1655 = vpack.c.b16 %v1557, %v1555
    %v1656 = vpack.c.b16 %v1558, %v1556
    %v1657 = vpack.c.b16 %v1561, %v1559
    %v1658 = vpack.c.b16 %v1562, %v1560
    %v1659 = vpack.c.b16 %v1565, %v1563
    %v1660 = vpack.c.b16 %v1566, %v1564
    %v1661 = vpack.c.b16 %v1569, %v1567
    %v1662 = vpack.c.b16 %v1570, %v1568
    %v1663 = vpack.c.b16 %v1573, %v1571
    %v1664 = vpack.c.b16 %v1574, %v1572
    %v1665 = vpack.c.b16 %v1577, %v1575
    %v1666 = vpack.c.b16 %v1578, %v1576
    %v1667 = vpack.c.b16 %v1581, %v1579
    %v1668 = vpack.c.b16 %v1582, %v1580
    %v1669 = vpack.c.b16 %v1585, %v1583
    %v1670 = vpack.c.b16 %v1586, %v1584
    %v1671 = vpack.c.b16 %v1589, %v1587
    %v1672 = vpack.c.b16 %v1590, %v1588
    %v1673 = vpack.c.b16 %v1593, %v1591
    %v1674 = vpack.c.b16 %v1594, %v1592
    %v1675 = vpack.c.b16 %v1597, %v1595
    %v1676 = vpack.c.b16 %v1598, %v1596
    %v1677 = vpack.c.b16 %v1601, %v1599
    %v1678 = vpack.c.b16 %v1602, %v1600
    %v1679 = vpack.c.b16 %v1605, %v1603
    %v1680 = vpack.c.b16 %v1606, %v1604
    %v1681 = vpack.c.b16 %v1609, %v1607
    %v1682 = vpack.c.b16 %v1610, %v1608
    %v1683 = vpack.c.b16 %v1613, %v1611
    %v1684 = vpack.c.b16 %v1614, %v1612
    %v1685 = vpack.c.b16 %v1617, %v1615
    %v1686 = vpack.c.b16 %v1618, %v1616
    %v1687 = vpack.c.b16 %v1621, %v1619
    %v1688 = vpack.c.b16 %v1622, %v1620
    %v1689 = vpack.c.b16 %v1625, %v1623
    %v1690 = vpack.c.b16 %v1626, %v1624
    %1755 = vmatprep.subr.bf16.mxu0 %v1628
    %1756 = vmatpush1.bf16.msra.mxu0 %v1627
    %1757 = vmatprep.subr.bf16.mxu0 %v1630
    %1758 = vmatpush1.bf16.msra.mxu0 %v1629
    %1759 = vmatprep.subr.bf16.mxu0 %v1632
    %1760 = vmatpush1.bf16.msra.mxu0 %v1631
    %1761 = vmatprep.subr.bf16.mxu0 %v1634
    %1762 = vmatpush1.bf16.msra.mxu0 %v1633
    %1763 = vmatprep.subr.bf16.mxu0 %v1636
    %1764 = vmatpush1.bf16.msra.mxu0 %v1635
    %1765 = vmatprep.subr.bf16.mxu0 %v1638
    %1766 = vmatpush1.bf16.msra.mxu0 %v1637
    %1767 = vmatprep.subr.bf16.mxu0 %v1640
    %1768 = vmatpush1.bf16.msra.mxu0 %v1639
    %1769 = vmatprep.subr.bf16.mxu0 %v1642
    %1770 = vmatpush1.bf16.msra.mxu0 %v1641
    %1771 = vmatprep.subr.bf16.mxu0 %v1644
    %1772 = vmatpush1.bf16.msra.mxu0 %v1643
    %1773 = vmatprep.subr.bf16.mxu0 %v1646
    %1774 = vmatpush1.bf16.msra.mxu0 %v1645
    %1775 = vmatprep.subr.bf16.mxu0 %v1648
    %1776 = vmatpush1.bf16.msra.mxu0 %v1647
    %1777 = vmatprep.subr.bf16.mxu0 %v1650
    %1778 = vmatpush1.bf16.msra.mxu0 %v1649
    %1779 = vmatprep.subr.bf16.mxu0 %v1652
    %1780 = vmatpush1.bf16.msra.mxu0 %v1651
    %1781 = vmatprep.subr.bf16.mxu0 %v1654
    %1782 = vmatpush1.bf16.msra.mxu0 %v1653
    %1783 = vmatprep.subr.bf16.mxu0 %v1656
    %1784 = vmatpush1.bf16.msra.mxu0 %v1655
    %1785 = vmatprep.subr.bf16.mxu0 %v1658
    %1786 = vmatpush1.bf16.msra.mxu0 %v1657
    %1787 = vmatprep.mubr.bf16.mxu0 %v1355
    %1788 = vmatmul.mubr.bf16.gmra.mrb[0].mxu0 %v1354
    %v1789 = vpop.f32.mrb[0].mxu0
    %v1790 = vadd.f32 %v1428, %v1789
    %v1791 = vpop.f32.mrb[0].mxu0
    %v1792 = vadd.f32 %v1432, %v1791
    %v1793 = vpop.f32.mrb[0].mxu0
    %v1794 = vpop.f32.mrb[0].mxu0
    %1795 = vdwg.mxu0
    %1796 = vmatprep.subr.bf16.mxu0 %v1660
    %1797 = vmatpush1.bf16.msra.mxu0 %v1659
    %1798 = vmatprep.subr.bf16.mxu0 %v1662
    %1799 = vmatpush1.bf16.msra.mxu0 %v1661
    %1800 = vmatprep.subr.bf16.mxu0 %v1664
    %1801 = vmatpush1.bf16.msra.mxu0 %v1663
    %1802 = vmatprep.subr.bf16.mxu0 %v1666
    %1803 = vmatpush1.bf16.msra.mxu0 %v1665
    %1804 = vmatprep.subr.bf16.mxu0 %v1668
    %1805 = vmatpush1.bf16.msra.mxu0 %v1667
    %1806 = vmatprep.subr.bf16.mxu0 %v1670
    %1807 = vmatpush1.bf16.msra.mxu0 %v1669
    %1808 = vmatprep.subr.bf16.mxu0 %v1672
    %1809 = vmatpush1.bf16.msra.mxu0 %v1671
    %1810 = vmatprep.subr.bf16.mxu0 %v1674
    %1811 = vmatpush1.bf16.msra.mxu0 %v1673
    %1812 = vmatprep.subr.bf16.mxu0 %v1676
    %1813 = vmatpush1.bf16.msra.mxu0 %v1675
    %1814 = vmatprep.subr.bf16.mxu0 %v1678
    %1815 = vmatpush1.bf16.msra.mxu0 %v1677
    %1816 = vmatprep.subr.bf16.mxu0 %v1680
    %1817 = vmatpush1.bf16.msra.mxu0 %v1679
    %1818 = vmatprep.subr.bf16.mxu0 %v1682
    %1819 = vmatpush1.bf16.msra.mxu0 %v1681
    %1820 = vmatprep.subr.bf16.mxu0 %v1684
    %1821 = vmatpush1.bf16.msra.mxu0 %v1683
    %1822 = vmatprep.subr.bf16.mxu0 %v1686
    %1823 = vmatpush1.bf16.msra.mxu0 %v1685
    %1824 = vmatprep.subr.bf16.mxu0 %v1688
    %1825 = vmatpush1.bf16.msra.mxu0 %v1687
    %1826 = vmatprep.subr.bf16.mxu0 %v1690
    %1827 = vmatpush1.bf16.msra.mxu0 %v1689
    %1828 = vmatprep.mubr.bf16.mxu0 %v1357
    %1829 = vmatmul.mubr.bf16.gmra.mrb[0].mxu0 %v1356
    %v1830 = vpop.f32.mrb[0].mxu0
    %v1831 = vadd.f32 %v1790, %v1830
    %v1832 = vpop.f32.mrb[0].mxu0
    %v1833 = vadd.f32 %v1792, %v1832
    %v1834 = vpop.f32.mrb[0].mxu0
    %v1835 = vpop.f32.mrb[0].mxu0
    %1836 = vdwg.mxu0
    %v1837 = vmax.f32 %v1831, 0.0
    %v1838 = vmax.f32 %v1833, 0.0
    %v1839 = vpack.c.bf16 %v1837, %v1837
    %v1840 = vpack.c.bf16 %v1838, %v1838
    %v1841 = vld [vmem:[#allocation7] sm:$0xf]
    %v1842 = vld [vmem:[#allocation7 + $0x4] sm:$0xf]
    %v1843 = vld [vmem:[#allocation7 + $0x8] sm:$0xf]
    %v1844 = vld [vmem:[#allocation7 + $0xc] sm:$0xf]
    %v1845 = vld [vmem:[#allocation7 + $0x10] sm:$0xf]
    %v1846 = vld [vmem:[#allocation7 + $0x14] sm:$0xf]
    %v1847 = vld [vmem:[#allocation7 + $0x18] sm:$0xf]
    %v1848 = vld [vmem:[#allocation7 + $0x1c] sm:$0xf]
    %v1849 = vld [vmem:[#allocation7 + $0x20] sm:$0xf]
    %v1850 = vld [vmem:[#allocation7 + $0x24] sm:$0xf]
    %v1851 = vld [vmem:[#allocation7 + $0x28] sm:$0xf]
    %v1852 = vld [vmem:[#allocation7 + $0x2c] sm:$0xf]
    %v1853 = vld [vmem:[#allocation7 + $0x30] sm:$0xf]
    %v1854 = vld [vmem:[#allocation7 + $0x34] sm:$0xf]
    %v1855 = vld [vmem:[#allocation7 + $0x38] sm:$0xf]
    %v1856 = vld [vmem:[#allocation7 + $0x3c] sm:$0xf]
    %v1857 = vld [vmem:[#allocation7 + $0x40] sm:$0xf]
    %v1858 = vld [vmem:[#allocation7 + $0x44] sm:$0xf]
    %v1859 = vld [vmem:[#allocation7 + $0x48] sm:$0xf]
    %v1860 = vld [vmem:[#allocation7 + $0x4c] sm:$0xf]
    %v1861 = vld [vmem:[#allocation7 + $0x50] sm:$0xf]
    %v1862 = vld [vmem:[#allocation7 + $0x54] sm:$0xf]
    %v1863 = vld [vmem:[#allocation7 + $0x58] sm:$0xf]
    %v1864 = vld [vmem:[#allocation7 + $0x5c] sm:$0xf]
    %v1865 = vld [vmem:[#allocation7 + $0x60] sm:$0xf]
    %v1866 = vld [vmem:[#allocation7 + $0x64] sm:$0xf]
    %v1867 = vld [vmem:[#allocation7 + $0x68] sm:$0xf]
    %v1868 = vld [vmem:[#allocation7 + $0x6c] sm:$0xf]
    %v1869 = vld [vmem:[#allocation7 + $0x70] sm:$0xf]
    %v1870 = vld [vmem:[#allocation7 + $0x74] sm:$0xf]
    %v1871 = vld [vmem:[#allocation7 + $0x78] sm:$0xf]
    %v1872 = vld [vmem:[#allocation7 + $0x7c] sm:$0xf]
    %v1873 = vld [vmem:[#allocation9 + $0x3] ss:$0 sm:$0xff]
    %v1906 = vunpack.c.l.b16 %v1841
    %v1907 = vunpack.c.l.b16 %v1842
    %v1908 = vunpack.c.l.b16 %v1843
    %v1909 = vunpack.c.l.b16 %v1844
    %v1910 = vunpack.c.l.b16 %v1845
    %v1911 = vunpack.c.l.b16 %v1846
    %v1912 = vunpack.c.l.b16 %v1847
    %v1913 = vunpack.c.l.b16 %v1848
    %v1914 = vunpack.c.l.b16 %v1849
    %v1915 = vunpack.c.l.b16 %v1850
    %v1916 = vunpack.c.l.b16 %v1851
    %v1917 = vunpack.c.l.b16 %v1852
    %v1918 = vunpack.c.l.b16 %v1853
    %v1919 = vunpack.c.l.b16 %v1854
    %v1920 = vunpack.c.l.b16 %v1855
    %v1921 = vunpack.c.l.b16 %v1856
    %v1922 = vunpack.c.l.b16 %v1857
    %v1923 = vunpack.c.l.b16 %v1858
    %v1924 = vunpack.c.l.b16 %v1859
    %v1925 = vunpack.c.l.b16 %v1860
    %v1926 = vunpack.c.l.b16 %v1861
    %v1927 = vunpack.c.l.b16 %v1862
    %v1928 = vunpack.c.l.b16 %v1863
    %v1929 = vunpack.c.l.b16 %v1864
    %v1930 = vunpack.c.l.b16 %v1865
    %v1931 = vunpack.c.l.b16 %v1866
    %v1932 = vunpack.c.l.b16 %v1867
    %v1933 = vunpack.c.l.b16 %v1868
    %v1934 = vunpack.c.l.b16 %v1869
    %v1935 = vunpack.c.l.b16 %v1870
    %v1936 = vunpack.c.l.b16 %v1871
    %v1937 = vunpack.c.l.b16 %v1872
    %v1938 = vpack.c.b16 %v1907, %v1906
    %v1939 = vpack.c.b16 %v1909, %v1908
    %v1940 = vpack.c.b16 %v1911, %v1910
    %v1941 = vpack.c.b16 %v1913, %v1912
    %v1942 = vpack.c.b16 %v1915, %v1914
    %v1943 = vpack.c.b16 %v1917, %v1916
    %v1944 = vpack.c.b16 %v1919, %v1918
    %v1945 = vpack.c.b16 %v1921, %v1920
    %v1946 = vpack.c.b16 %v1923, %v1922
    %v1947 = vpack.c.b16 %v1925, %v1924
    %v1948 = vpack.c.b16 %v1927, %v1926
    %v1949 = vpack.c.b16 %v1929, %v1928
    %v1950 = vpack.c.b16 %v1931, %v1930
    %v1951 = vpack.c.b16 %v1933, %v1932
    %v1952 = vpack.c.b16 %v1935, %v1934
    %v1953 = vpack.c.b16 %v1937, %v1936
    %1970 = vmatprep.subr.bf16.mxu0 0
    %1971 = vmatpush1.bf16.msra.mxu0 %v1938
    %1972 = vmatprep.subr.bf16.mxu0 0
    %1973 = vmatpush1.bf16.msra.mxu0 %v1939
    %1974 = vmatprep.subr.bf16.mxu0 0
    %1975 = vmatpush1.bf16.msra.mxu0 %v1940
    %1976 = vmatprep.subr.bf16.mxu0 0
    %1977 = vmatpush1.bf16.msra.mxu0 %v1941
    %1978 = vmatprep.subr.bf16.mxu0 0
    %1979 = vmatpush1.bf16.msra.mxu0 %v1942
    %1980 = vmatprep.subr.bf16.mxu0 0
    %1981 = vmatpush1.bf16.msra.mxu0 %v1943
    %1982 = vmatprep.subr.bf16.mxu0 0
    %1983 = vmatpush1.bf16.msra.mxu0 %v1944
    %1984 = vmatprep.subr.bf16.mxu0 0
    %1985 = vmatpush1.bf16.msra.mxu0 %v1945
    %1986 = vmatprep.subr.bf16.mxu0 0
    %1987 = vmatpush1.bf16.msra.mxu0 %v1946
    %1988 = vmatprep.subr.bf16.mxu0 0
    %1989 = vmatpush1.bf16.msra.mxu0 %v1947
    %1990 = vmatprep.subr.bf16.mxu0 0
    %1991 = vmatpush1.bf16.msra.mxu0 %v1948
    %1992 = vmatprep.subr.bf16.mxu0 0
    %1993 = vmatpush1.bf16.msra.mxu0 %v1949
    %1994 = vmatprep.subr.bf16.mxu0 0
    %1995 = vmatpush1.bf16.msra.mxu0 %v1950
    %1996 = vmatprep.subr.bf16.mxu0 0
    %1997 = vmatpush1.bf16.msra.mxu0 %v1951
    %1998 = vmatprep.subr.bf16.mxu0 0
    %1999 = vmatpush1.bf16.msra.mxu0 %v1952
    %2000 = vmatprep.subr.bf16.mxu0 0
    %2001 = vmatpush1.bf16.msra.mxu0 %v1953
    %2002 = vmatprep.mubr.bf16.mxu0 %v1840
    %2003 = vmatmul.mubr.bf16.gmra.mrb[0].mxu0 %v1839
    %v2004 = vpop.f32.mrb[0].mxu0
    %v2005 = vadd.f32 %v1873, %v2004
    %v2006 = vpop.f32.mrb[0].mxu0
    %v2007 = vpop.f32.mrb[0].mxu0
    %v2008 = vpop.f32.mrb[0].mxu0
    %2009 = vdwg.mxu0
    %v2010 = vlaneseq
    %v2011 = vand.u32 %v2010, 127
    %vm2012 = vcmp.lt.s32.totalorder %v2011, 81
    %v2013 = vsel %vm2012, 1, 0
    %vm2014 = vcmp.eq.s32.totalorder %v2013, 1
    %v2015 = vsel %vm2014, %v2005, -1e+30
    %2016 = vmax.xlane.f32.xlu0 %v2015
    %v2017 = vpop.xlane.xlu0 %2016
    %v2018 = vsub.f32 %v2015, %v2017
    %v2019 = vmul.f32 %v2018, 1.442695
    %v2020 = vpow.pop %v2019
    %2021 = vadd.xlane.f32.xlu0 %v2020
    %v2022 = vpop.xlane.xlu0 %2021
    %v2023 = vlog2.pop %v2022
    %v2024 = vmul.f32 %v2023, 0.6931472
    %v2025 = vsub.f32 %v2018, %v2024
    %v2026 = vtanh.pop %v2005
    %v2027 = vsel %vm2014, %v2025, %v2026
    %2028 = vst [vmem:[%s6] sm:$0xff] %v2027
    // Predicated region
    $region46: #{splendor_forward.1} parent=1 // pred_check
      _
    $region47: #{splendor_forward.1} parent=1 // pred_check_branch
      %2030 = sbr.rel (0) target = $region49
    $region48: #{splendor_forward.1} parent=1 // pred_region
      _
    $region49: #{splendor_forward.1} parent=1 // pred_fallthru
      _
    // Predicated region
    $region50: #{splendor_forward.1} parent=1 // pred_check
      _
    $region51: #{splendor_forward.1} parent=1 // pred_check_branch
      %2032 = sbr.rel (0) target = $region53
    $region52: #{splendor_forward.1} parent=1 // pred_region
      _
    $region53: #{splendor_forward.1} parent=1 // pred_fallthru
      _
    %2033 = vsyncpa [#allocation3], 1
    %2034 = vsyncpa [#allocation5], 1
    %2035 = vsyncpa [#allocation8], 1

</llo_original>
